<compile_context>
chip_gen: v7x
topology: tpu7x:2x2x1
jax: 0.10.0
libtpu: 0.0.40
codegen_flags: <defaults>
</compile_context>

<pallas_src>
import math
import functools

import numpy as np
import jax
import jax.numpy as jnp
from jax.experimental import pallas as pl
from jax.experimental.pallas import tpu as pltpu

# ---------------- config (StableLmConfig, synthetic small) ----------------
HIDDEN = 64
NUM_HEADS = 4
HEAD_DIM = HIDDEN // NUM_HEADS            # 16
NUM_KV_HEADS = 2
NUM_KV_GROUPS = NUM_HEADS // NUM_KV_HEADS # 2
PARTIAL_ROTARY_FACTOR = 0.25
ROT_DIM = int(PARTIAL_ROTARY_FACTOR * HEAD_DIM)  # 4
ROPE_THETA = 10000.0
LAYER_NORM_EPS = 1e-5
QK_LAYERNORM = True
USE_QKV_BIAS = True
ATTN_DROPOUT_P = 0.0   # eval / p=0 -> dropout is a no-op
KV_BIT = 16            # >=16 -> pseudo-quantization branch is skipped
# TODO(synk): pseudo_quantize_tensor (kv_bit < 16), past_key_value Cache update,
#             and per-batch padding attention masks are not implemented — this is
#             the no-cache, full-precision, causal-only StableLm path.

BATCH = 2
SEQ = 8

QKV_N = (NUM_HEADS + 2 * NUM_KV_HEADS) * HEAD_DIM   # 64 + 32 + 32 = 128 (lane dense)


# ---------------- rotary tables (HF StableLmRotaryEmbedding) ----------------
def rope_cos_sin(seq_len, dim, base):
    inv_freq = 1.0 / (base ** (jnp.arange(0, dim, 2, dtype=jnp.float32) / dim))
    t = jnp.arange(seq_len, dtype=jnp.float32)
    freqs = jnp.outer(t, inv_freq)                     # [S, dim/2]
    emb = jnp.concatenate([freqs, freqs], axis=-1)     # [S, dim]
    return jnp.cos(emb), jnp.sin(emb)


# ---------------- fused Pallas kernel ----------------
def _fused_attn_kernel(x_ref, wqkv_ref, bqkv_ref, wo_ref, qln_ref, kln_ref,
                       cos_ref, sin_ref, o_ref, *, eps, scale):
    S = x_ref.shape[1]
    D = HEAD_DIM

    x = x_ref[0]                                       # [S, H] f32

    # Fused QKV projection: one lane-dense [S, 128] MXU matmul + bias.
    qkv = jnp.dot(x, wqkv_ref[...], preferred_element_type=jnp.float32) + bqkv_ref[...]

    cos = cos_ref[0]                                   # [S, ROT_DIM]
    sin = sin_ref[0]
    qln = qln_ref[...]                                 # [NUM_HEADS, D]
    kln = kln_ref[...]                                 # [NUM_KV_HEADS, D]

    def layernorm(h2d, gamma):                         # per-head LN, weight only
        mean = jnp.mean(h2d, axis=-1, keepdims=True)
        var = jnp.mean(jnp.square(h2d - mean), axis=-1, keepdims=True)
        return (h2d - mean) * jax.lax.rsqrt(var + eps) * gamma

    def rope(h2d):                                     # partial rotary on first ROT_DIM
        rot, rest = h2d[:, :ROT_DIM], h2d[:, ROT_DIM:]
        half = ROT_DIM // 2
        rot_half = jnp.concatenate([-rot[:, half:], rot[:, :half]], axis=-1)
        return jnp.concatenate([rot * cos + rot_half * sin, rest], axis=-1)

    # Causal mask generated in-kernel — no [S,S] DMA input.
    row = jax.lax.broadcasted_iota(jnp.int32, (S, S), 0)
    col = jax.lax.broadcasted_iota(jnp.int32, (S, S), 1)
    causal = col <= row
    neg = jnp.float32(-1e30)

    k_off = NUM_HEADS * D
    v_off = k_off + NUM_KV_HEADS * D

    # KV heads: LayerNorm + RoPE once per kv head (shared by each GQA group).
    k_heads, v_heads = [], []
    for kh in range(NUM_KV_HEADS):
        k_h = qkv[:, k_off + kh * D:k_off + (kh + 1) * D]
        if QK_LAYERNORM:
            k_h = layernorm(k_h, kln[kh:kh + 1, :])
        k_heads.append(rope(k_h))
        v_heads.append(qkv[:, v_off + kh * D:v_off + (kh + 1) * D])

    outs = []
    for h in range(NUM_HEADS):
        q_h = qkv[:, h * D:(h + 1) * D]
        if QK_LAYERNORM:
            q_h = layernorm(q_h, qln[h:h + 1, :])
        q_h = rope(q_h) * scale                        # fold 1/sqrt(D) into q
        k_h = k_heads[h // NUM_KV_GROUPS]
        v_h = v_heads[h // NUM_KV_GROUPS]

        s = jnp.dot(q_h, k_h.T, preferred_element_type=jnp.float32)   # [S, S]
        s = jnp.where(causal, s, neg)
        m = jnp.max(s, axis=-1, keepdims=True)
        e = jnp.exp(s - m)
        l = jnp.sum(e, axis=-1, keepdims=True)
        p = e * pl.reciprocal(l, approx=True)          # EUP slot — free vs VPU/MXU
        outs.append(jnp.dot(p, v_h, preferred_element_type=jnp.float32))

    # [S, H] already in (s, h*d) layout — no transpose needed before o_proj.
    ctx = jnp.concatenate(outs, axis=-1)
    out = jnp.dot(ctx, wo_ref[...], preferred_element_type=jnp.float32)
    o_ref[0] = out.astype(o_ref.dtype)


def stablelm_attention_forward(params, hidden_states, position_ids):
    B, S, H = hidden_states.shape
    dtype = hidden_states.dtype

    cos, sin = rope_cos_sin(S, ROT_DIM, ROPE_THETA)
    cos_g = cos[position_ids].astype(jnp.float32)      # [B, S, ROT_DIM]
    sin_g = sin[position_ids].astype(jnp.float32)

    kernel = functools.partial(_fused_attn_kernel,
                               eps=LAYER_NORM_EPS,
                               scale=1.0 / math.sqrt(HEAD_DIM))

    return pl.pallas_call(
        kernel,
        out_shape=jax.ShapeDtypeStruct((B, S, H), dtype),
        grid_spec=pltpu.PrefetchScalarGridSpec(
            num_scalar_prefetch=0,
            grid=(B,),
            in_specs=[
                pl.BlockSpec((1, S, H), lambda b: (b, 0, 0)),             # hidden
                pl.BlockSpec((H, QKV_N), lambda b: (0, 0)),               # fused W_qkv
                pl.BlockSpec((1, QKV_N), lambda b: (0, 0)),               # fused b_qkv
                pl.BlockSpec((H, H), lambda b: (0, 0)),                   # W_o
                pl.BlockSpec((NUM_HEADS, HEAD_DIM), lambda b: (0, 0)),    # q LN weight
                pl.BlockSpec((NUM_KV_HEADS, HEAD_DIM), lambda b: (0, 0)), # k LN weight
                pl.BlockSpec((1, S, ROT_DIM), lambda b: (b, 0, 0)),       # cos
                pl.BlockSpec((1, S, ROT_DIM), lambda b: (b, 0, 0)),       # sin
            ],
            out_specs=pl.BlockSpec((1, S, H), lambda b: (b, 0, 0)),
        ),
        compiler_params=pltpu.CompilerParams(
            dimension_semantics=("parallel",)),        # B=2 -> one batch per TC on v7x
    )(hidden_states, params["w_qkv"], params["b_qkv"], params["wo"],
      params["q_ln_w"], params["k_ln_w"], cos_g, sin_g)


# ---------------- pure-JAX reference (mirrors the torch module) ----------------
def _reference_forward(params, hidden_states, position_ids):
    B, S, H = hidden_states.shape
    x2d = hidden_states.reshape(B * S, H)
    qkv = x2d @ params["w_qkv"] + params["b_qkv"]
    nq, nk = NUM_HEADS * HEAD_DIM, NUM_KV_HEADS * HEAD_DIM
    q = qkv[:, :nq].reshape(B, S, NUM_HEADS, HEAD_DIM).transpose(0, 2, 1, 3)
    k = qkv[:, nq:nq + nk].reshape(B, S, NUM_KV_HEADS, HEAD_DIM).transpose(0, 2, 1, 3)
    v = qkv[:, nq + nk:].reshape(B, S, NUM_KV_HEADS, HEAD_DIM).transpose(0, 2, 1, 3)

    def ln(t, g):
        mean = jnp.mean(t, axis=-1, keepdims=True)
        var = jnp.mean(jnp.square(t - mean), axis=-1, keepdims=True)
        return (t - mean) / jnp.sqrt(var + LAYER_NORM_EPS) * g[None, :, None, :]

    if QK_LAYERNORM:
        q = ln(q, params["q_ln_w"])
        k = ln(k, params["k_ln_w"])

    cos, sin = rope_cos_sin(S, ROT_DIM, ROPE_THETA)
    cos_b = cos[position_ids][:, None, :, :]
    sin_b = sin[position_ids][:, None, :, :]

    def rope(t):
        rot, rest = t[..., :ROT_DIM], t[..., ROT_DIM:]
        half = ROT_DIM // 2
        rot_half = jnp.concatenate([-rot[..., half:], rot[..., :half]], axis=-1)
        return jnp.concatenate([rot * cos_b + rot_half * sin_b, rest], axis=-1)

    q, k = rope(q), rope(k)
    k = jnp.repeat(k, NUM_KV_GROUPS, axis=1)
    v = jnp.repeat(v, NUM_KV_GROUPS, axis=1)

    s = jnp.einsum("bhqd,bhkd->bhqk", q, k) / math.sqrt(HEAD_DIM)
    r = jnp.arange(S)[:, None]
    c = jnp.arange(S)[None, :]
    s = jnp.where(c <= r, s, -1e30)
    p = jax.nn.softmax(s, axis=-1)
    ctx = jnp.einsum("bhqk,bhkd->bhqd", p, v)
    ctx = ctx.transpose(0, 2, 1, 3).reshape(B * S, H)
    return (ctx @ params["wo"]).reshape(B, S, H)


# ---------------- deterministic parameter init ----------------
def init_params(key):
    ks = jax.random.split(key, 4)
    s = 0.02
    wq = s * jax.random.normal(ks[0], (HIDDEN, NUM_HEADS * HEAD_DIM), jnp.float32)
    wk = s * jax.random.normal(ks[1], (HIDDEN, NUM_KV_HEADS * HEAD_DIM), jnp.float32)
    wv = s * jax.random.normal(ks[2], (HIDDEN, NUM_KV_HEADS * HEAD_DIM), jnp.float32)
    wo = s * jax.random.normal(ks[3], (HIDDEN, HIDDEN), jnp.float32)
    bias_val = 0.01 if USE_QKV_BIAS else 0.0
    bq = jnp.full((1, NUM_HEADS * HEAD_DIM), bias_val, jnp.float32)
    bk = jnp.full((1, NUM_KV_HEADS * HEAD_DIM), bias_val, jnp.float32)
    bv = jnp.full((1, NUM_KV_HEADS * HEAD_DIM), bias_val, jnp.float32)
    return {
        # fused, lane-dense [H, 128] QKV projection (wq | wk | wv) + fused bias
        "w_qkv": jnp.concatenate([wq, wk, wv], axis=1),
        "b_qkv": jnp.concatenate([bq, bk, bv], axis=1),
        "wo": wo,                                          # o_proj has no bias
        "q_ln_w": jnp.ones((NUM_HEADS, HEAD_DIM), jnp.float32),
        "k_ln_w": jnp.ones((NUM_KV_HEADS, HEAD_DIM), jnp.float32),
    }


if __name__ == "__main__":
    key = jax.random.PRNGKey(0)
    k_params, k_x = jax.random.split(key)

    params = init_params(k_params)
    hidden_states = jax.random.normal(k_x, (BATCH, SEQ, HIDDEN), jnp.float32)
    position_ids = jnp.broadcast_to(
        jnp.arange(SEQ, dtype=jnp.int32)[None, :], (BATCH, SEQ))

    fwd = jax.jit(stablelm_attention_forward)
    out = fwd(params, hidden_states, position_ids)
    jax.block_until_ready(out)

    assert out.shape == (BATCH, SEQ, HIDDEN)
    assert bool(jnp.all(jnp.isfinite(out)))

    ref = _reference_forward(params, hidden_states, position_ids)
    np.testing.assert_allclose(np.asarray(out), np.asarray(ref), rtol=2e-2, atol=2e-4)

    print("KERNEL_OK")
</pallas_src>

<mosaic_0001>
module attributes {stable_mosaic.version = 11 : i64} {
  func.func @_fused_attn_kernel(%arg0: i32, %arg1: memref<1x8x64xf32, #tpu.memory_space<vmem>>, %arg2: memref<64x128xf32, #tpu.memory_space<vmem>>, %arg3: memref<1x128xf32, #tpu.memory_space<vmem>>, %arg4: memref<64x64xf32, #tpu.memory_space<vmem>>, %arg5: memref<4x16xf32, #tpu.memory_space<vmem>>, %arg6: memref<2x16xf32, #tpu.memory_space<vmem>>, %arg7: memref<1x8x4xf32, #tpu.memory_space<vmem>>, %arg8: memref<1x8x4xf32, #tpu.memory_space<vmem>>, %arg9: memref<1x8x64xf32, #tpu.memory_space<vmem>>) attributes {dimension_semantics = [#tpu.dimension_semantics<parallel>], iteration_bounds = array<i64: 2>, scalar_prefetch = 0 : i64, scratch_operands = 0 : i64, tpu.core_type = #tpu.core_type<tc>, window_params = [{transform_indices = @transform_0, window_bounds = array<i64: 1, 8, 64>}, {pipeline_mode = #tpu.pipeline_mode<synchronous>, transform_indices = @transform_1, window_bounds = array<i64: 64, 128>}, {pipeline_mode = #tpu.pipeline_mode<synchronous>, transform_indices = @transform_2, window_bounds = array<i64: 1, 128>}, {pipeline_mode = #tpu.pipeline_mode<synchronous>, transform_indices = @transform_3, window_bounds = array<i64: 64, 64>}, {pipeline_mode = #tpu.pipeline_mode<synchronous>, transform_indices = @transform_4, window_bounds = array<i64: 4, 16>}, {pipeline_mode = #tpu.pipeline_mode<synchronous>, transform_indices = @transform_5, window_bounds = array<i64: 2, 16>}, {transform_indices = @transform_6, window_bounds = array<i64: 1, 8, 4>}, {transform_indices = @transform_7, window_bounds = array<i64: 1, 8, 4>}, {transform_indices = @transform_8, window_bounds = array<i64: 1, 8, 64>}]} {
    %c0 = arith.constant 0 : index
    %c0_0 = arith.constant 0 : index
    %c0_1 = arith.constant 0 : index
    %0 = vector.load %arg1[%c0, %c0_0, %c0_1] : memref<1x8x64xf32, #tpu.memory_space<vmem>>, vector<1x8x64xf32>
    %1 = vector.shape_cast %0 : vector<1x8x64xf32> to vector<8x64xf32>
    %c0_2 = arith.constant 0 : index
    %c0_3 = arith.constant 0 : index
    %2 = vector.load %arg2[%c0_2, %c0_3] : memref<64x128xf32, #tpu.memory_space<vmem>>, vector<64x128xf32>
    %cst = arith.constant dense<0.000000e+00> : vector<8x128xf32>
    %3 = tpu.matmul %1, %2, %cst {dimension_numbers = #tpu.dot_dimension_numbers<[1], [0], [0], [1], [0, 0, 1, 1], [], []>} : vector<8x64xf32>, vector<64x128xf32>, vector<8x128xf32> -> vector<8x128xf32>
    %c0_4 = arith.constant 0 : index
    %c0_5 = arith.constant 0 : index
    %4 = vector.load %arg3[%c0_4, %c0_5] : memref<1x128xf32, #tpu.memory_space<vmem>>, vector<1x128xf32>
    %5 = vector.broadcast %4 : vector<1x128xf32> to vector<8x128xf32>
    %6 = arith.addf %3, %5 : vector<8x128xf32>
    %c0_6 = arith.constant 0 : index
    %c0_7 = arith.constant 0 : index
    %c0_8 = arith.constant 0 : index
    %7 = vector.load %arg7[%c0_6, %c0_7, %c0_8] : memref<1x8x4xf32, #tpu.memory_space<vmem>>, vector<1x8x4xf32>
    %8 = vector.shape_cast %7 : vector<1x8x4xf32> to vector<8x4xf32>
    %c0_9 = arith.constant 0 : index
    %c0_10 = arith.constant 0 : index
    %c0_11 = arith.constant 0 : index
    %9 = vector.load %arg8[%c0_9, %c0_10, %c0_11] : memref<1x8x4xf32, #tpu.memory_space<vmem>>, vector<1x8x4xf32>
    %10 = vector.shape_cast %9 : vector<1x8x4xf32> to vector<8x4xf32>
    %c0_12 = arith.constant 0 : index
    %c0_13 = arith.constant 0 : index
    %11 = vector.load %arg5[%c0_12, %c0_13] : memref<4x16xf32, #tpu.memory_space<vmem>>, vector<4x16xf32>
    %c0_14 = arith.constant 0 : index
    %c0_15 = arith.constant 0 : index
    %12 = vector.load %arg6[%c0_14, %c0_15] : memref<2x16xf32, #tpu.memory_space<vmem>>, vector<2x16xf32>
    %13 = tpu.iota {dimensions = array<i32: 0>} : vector<8x8xi32>
    %14 = tpu.iota {dimensions = array<i32: 1>} : vector<8x8xi32>
    %15 = arith.cmpi sle, %14, %13 : vector<8x8xi32>
    %16 = vector.extract_strided_slice %6 {offsets = [0, 64], sizes = [8, 16], strides = [1, 1]} : vector<8x128xf32> to vector<8x16xf32>
    %17 = vector.extract_strided_slice %12 {offsets = [0, 0], sizes = [1, 16], strides = [1, 1]} : vector<2x16xf32> to vector<1x16xf32>
    %cst_16 = arith.constant dense<0.000000e+00> : vector<8xf32>
    %18 = vector.multi_reduction <add>, %16, %cst_16 [1] : vector<8x16xf32> to vector<8xf32>
    %19 = vector.shape_cast %18 : vector<8xf32> to vector<8x1xf32>
    %cst_17 = arith.constant 1.600000e+01 : f32
    %20 = vector.broadcast %cst_17 : f32 to vector<8x1xf32>
    %21 = arith.divf %19, %20 : vector<8x1xf32>
    %22 = vector.broadcast %21 : vector<8x1xf32> to vector<8x16xf32>
    %23 = arith.subf %16, %22 : vector<8x16xf32>
    %24 = arith.mulf %23, %23 : vector<8x16xf32>
    %cst_18 = arith.constant dense<0.000000e+00> : vector<8xf32>
    %25 = vector.multi_reduction <add>, %24, %cst_18 [1] : vector<8x16xf32> to vector<8xf32>
    %26 = vector.shape_cast %25 : vector<8xf32> to vector<8x1xf32>
    %cst_19 = arith.constant 1.600000e+01 : f32
    %27 = vector.broadcast %cst_19 : f32 to vector<8x1xf32>
    %28 = arith.divf %26, %27 : vector<8x1xf32>
    %29 = vector.broadcast %21 : vector<8x1xf32> to vector<8x16xf32>
    %30 = arith.subf %16, %29 : vector<8x16xf32>
    %cst_20 = arith.constant 9.99999974E-6 : f32
    %31 = vector.broadcast %cst_20 : f32 to vector<8x1xf32>
    %32 = arith.addf %28, %31 : vector<8x1xf32>
    %33 = math.rsqrt %32 : vector<8x1xf32>
    %34 = vector.broadcast %33 : vector<8x1xf32> to vector<8x16xf32>
    %35 = arith.mulf %30, %34 : vector<8x16xf32>
    %36 = vector.broadcast %17 : vector<1x16xf32> to vector<8x16xf32>
    %37 = arith.mulf %35, %36 : vector<8x16xf32>
    %38 = vector.extract_strided_slice %37 {offsets = [0, 0], sizes = [8, 4], strides = [1, 1]} : vector<8x16xf32> to vector<8x4xf32>
    %39 = vector.extract_strided_slice %37 {offsets = [0, 4], sizes = [8, 12], strides = [1, 1]} : vector<8x16xf32> to vector<8x12xf32>
    %40 = vector.extract_strided_slice %38 {offsets = [0, 2], sizes = [8, 2], strides = [1, 1]} : vector<8x4xf32> to vector<8x2xf32>
    %cst_21 = arith.constant 0.000000e+00 : f32
    %41 = vector.broadcast %cst_21 : f32 to vector<8x2xf32>
    %42 = arith.subf %41, %40 : vector<8x2xf32>
    %43 = vector.extract_strided_slice %38 {offsets = [0, 0], sizes = [8, 2], strides = [1, 1]} : vector<8x4xf32> to vector<8x2xf32>
    %44 = tpu.concatenate %42, %43 in 1 : vector<8x2xf32>, vector<8x2xf32> -> vector<8x4xf32>
    %45 = arith.mulf %38, %8 : vector<8x4xf32>
    %46 = arith.mulf %44, %10 : vector<8x4xf32>
    %47 = arith.addf %45, %46 : vector<8x4xf32>
    %48 = tpu.concatenate %47, %39 in 1 : vector<8x4xf32>, vector<8x12xf32> -> vector<8x16xf32>
    %49 = vector.extract_strided_slice %6 {offsets = [0, 96], sizes = [8, 16], strides = [1, 1]} : vector<8x128xf32> to vector<8x16xf32>
    %50 = vector.extract_strided_slice %6 {offsets = [0, 80], sizes = [8, 16], strides = [1, 1]} : vector<8x128xf32> to vector<8x16xf32>
    %51 = vector.extract_strided_slice %12 {offsets = [1, 0], sizes = [1, 16], strides = [1, 1]} : vector<2x16xf32> to vector<1x16xf32>
    %cst_22 = arith.constant dense<0.000000e+00> : vector<8xf32>
    %52 = vector.multi_reduction <add>, %50, %cst_22 [1] : vector<8x16xf32> to vector<8xf32>
    %53 = vector.shape_cast %52 : vector<8xf32> to vector<8x1xf32>
    %cst_23 = arith.constant 1.600000e+01 : f32
    %54 = vector.broadcast %cst_23 : f32 to vector<8x1xf32>
    %55 = arith.divf %53, %54 : vector<8x1xf32>
    %56 = vector.broadcast %55 : vector<8x1xf32> to vector<8x16xf32>
    %57 = arith.subf %50, %56 : vector<8x16xf32>
    %58 = arith.mulf %57, %57 : vector<8x16xf32>
    %cst_24 = arith.constant dense<0.000000e+00> : vector<8xf32>
    %59 = vector.multi_reduction <add>, %58, %cst_24 [1] : vector<8x16xf32> to vector<8xf32>
    %60 = vector.shape_cast %59 : vector<8xf32> to vector<8x1xf32>
    %cst_25 = arith.constant 1.600000e+01 : f32
    %61 = vector.broadcast %cst_25 : f32 to vector<8x1xf32>
    %62 = arith.divf %60, %61 : vector<8x1xf32>
    %63 = vector.broadcast %55 : vector<8x1xf32> to vector<8x16xf32>
    %64 = arith.subf %50, %63 : vector<8x16xf32>
    %cst_26 = arith.constant 9.99999974E-6 : f32
    %65 = vector.broadcast %cst_26 : f32 to vector<8x1xf32>
    %66 = arith.addf %62, %65 : vector<8x1xf32>
    %67 = math.rsqrt %66 : vector<8x1xf32>
    %68 = vector.broadcast %67 : vector<8x1xf32> to vector<8x16xf32>
    %69 = arith.mulf %64, %68 : vector<8x16xf32>
    %70 = vector.broadcast %51 : vector<1x16xf32> to vector<8x16xf32>
    %71 = arith.mulf %69, %70 : vector<8x16xf32>
    %72 = vector.extract_strided_slice %71 {offsets = [0, 0], sizes = [8, 4], strides = [1, 1]} : vector<8x16xf32> to vector<8x4xf32>
    %73 = vector.extract_strided_slice %71 {offsets = [0, 4], sizes = [8, 12], strides = [1, 1]} : vector<8x16xf32> to vector<8x12xf32>
    %74 = vector.extract_strided_slice %72 {offsets = [0, 2], sizes = [8, 2], strides = [1, 1]} : vector<8x4xf32> to vector<8x2xf32>
    %cst_27 = arith.constant 0.000000e+00 : f32
    %75 = vector.broadcast %cst_27 : f32 to vector<8x2xf32>
    %76 = arith.subf %75, %74 : vector<8x2xf32>
    %77 = vector.extract_strided_slice %72 {offsets = [0, 0], sizes = [8, 2], strides = [1, 1]} : vector<8x4xf32> to vector<8x2xf32>
    %78 = tpu.concatenate %76, %77 in 1 : vector<8x2xf32>, vector<8x2xf32> -> vector<8x4xf32>
    %79 = arith.mulf %72, %8 : vector<8x4xf32>
    %80 = arith.mulf %78, %10 : vector<8x4xf32>
    %81 = arith.addf %79, %80 : vector<8x4xf32>
    %82 = tpu.concatenate %81, %73 in 1 : vector<8x4xf32>, vector<8x12xf32> -> vector<8x16xf32>
    %83 = vector.extract_strided_slice %6 {offsets = [0, 112], sizes = [8, 16], strides = [1, 1]} : vector<8x128xf32> to vector<8x16xf32>
    %84 = vector.extract_strided_slice %6 {offsets = [0, 0], sizes = [8, 16], strides = [1, 1]} : vector<8x128xf32> to vector<8x16xf32>
    %85 = vector.extract_strided_slice %11 {offsets = [0, 0], sizes = [1, 16], strides = [1, 1]} : vector<4x16xf32> to vector<1x16xf32>
    %cst_28 = arith.constant dense<0.000000e+00> : vector<8xf32>
    %86 = vector.multi_reduction <add>, %84, %cst_28 [1] : vector<8x16xf32> to vector<8xf32>
    %87 = vector.shape_cast %86 : vector<8xf32> to vector<8x1xf32>
    %cst_29 = arith.constant 1.600000e+01 : f32
    %88 = vector.broadcast %cst_29 : f32 to vector<8x1xf32>
    %89 = arith.divf %87, %88 : vector<8x1xf32>
    %90 = vector.broadcast %89 : vector<8x1xf32> to vector<8x16xf32>
    %91 = arith.subf %84, %90 : vector<8x16xf32>
    %92 = arith.mulf %91, %91 : vector<8x16xf32>
    %cst_30 = arith.constant dense<0.000000e+00> : vector<8xf32>
    %93 = vector.multi_reduction <add>, %92, %cst_30 [1] : vector<8x16xf32> to vector<8xf32>
    %94 = vector.shape_cast %93 : vector<8xf32> to vector<8x1xf32>
    %cst_31 = arith.constant 1.600000e+01 : f32
    %95 = vector.broadcast %cst_31 : f32 to vector<8x1xf32>
    %96 = arith.divf %94, %95 : vector<8x1xf32>
    %97 = vector.broadcast %89 : vector<8x1xf32> to vector<8x16xf32>
    %98 = arith.subf %84, %97 : vector<8x16xf32>
    %cst_32 = arith.constant 9.99999974E-6 : f32
    %99 = vector.broadcast %cst_32 : f32 to vector<8x1xf32>
    %100 = arith.addf %96, %99 : vector<8x1xf32>
    %101 = math.rsqrt %100 : vector<8x1xf32>
    %102 = vector.broadcast %101 : vector<8x1xf32> to vector<8x16xf32>
    %103 = arith.mulf %98, %102 : vector<8x16xf32>
    %104 = vector.broadcast %85 : vector<1x16xf32> to vector<8x16xf32>
    %105 = arith.mulf %103, %104 : vector<8x16xf32>
    %106 = vector.extract_strided_slice %105 {offsets = [0, 0], sizes = [8, 4], strides = [1, 1]} : vector<8x16xf32> to vector<8x4xf32>
    %107 = vector.extract_strided_slice %105 {offsets = [0, 4], sizes = [8, 12], strides = [1, 1]} : vector<8x16xf32> to vector<8x12xf32>
    %108 = vector.extract_strided_slice %106 {offsets = [0, 2], sizes = [8, 2], strides = [1, 1]} : vector<8x4xf32> to vector<8x2xf32>
    %cst_33 = arith.constant 0.000000e+00 : f32
    %109 = vector.broadcast %cst_33 : f32 to vector<8x2xf32>
    %110 = arith.subf %109, %108 : vector<8x2xf32>
    %111 = vector.extract_strided_slice %106 {offsets = [0, 0], sizes = [8, 2], strides = [1, 1]} : vector<8x4xf32> to vector<8x2xf32>
    %112 = tpu.concatenate %110, %111 in 1 : vector<8x2xf32>, vector<8x2xf32> -> vector<8x4xf32>
    %113 = arith.mulf %106, %8 : vector<8x4xf32>
    %114 = arith.mulf %112, %10 : vector<8x4xf32>
    %115 = arith.addf %113, %114 : vector<8x4xf32>
    %116 = tpu.concatenate %115, %107 in 1 : vector<8x4xf32>, vector<8x12xf32> -> vector<8x16xf32>
    %cst_34 = arith.constant 2.500000e-01 : f32
    %117 = vector.broadcast %cst_34 : f32 to vector<8x16xf32>
    %118 = arith.mulf %116, %117 : vector<8x16xf32>
    %119 = tpu.transpose %48, [1, 0] : vector<8x16xf32> -> vector<16x8xf32>
    %cst_35 = arith.constant dense<0.000000e+00> : vector<8x8xf32>
    %120 = tpu.matmul %118, %119, %cst_35 {dimension_numbers = #tpu.dot_dimension_numbers<[1], [0], [0], [1], [0, 0, 1, 1], [], []>} : vector<8x16xf32>, vector<16x8xf32>, vector<8x8xf32> -> vector<8x8xf32>
    %cst_36 = arith.constant -1.000000e+30 : f32
    %121 = vector.broadcast %cst_36 : f32 to vector<8x8xf32>
    %122 = arith.select %15, %120, %121 : vector<8x8xi1>, vector<8x8xf32>
    %cst_37 = arith.constant dense<0xFF800000> : vector<8xf32>
    %123 = vector.multi_reduction <maximumf>, %122, %cst_37 [1] : vector<8x8xf32> to vector<8xf32>
    %124 = vector.shape_cast %123 : vector<8xf32> to vector<8x1xf32>
    %125 = vector.broadcast %124 : vector<8x1xf32> to vector<8x8xf32>
    %126 = arith.subf %122, %125 : vector<8x8xf32>
    %127 = math.exp %126 : vector<8x8xf32>
    %cst_38 = arith.constant dense<0.000000e+00> : vector<8xf32>
    %128 = vector.multi_reduction <add>, %127, %cst_38 [1] : vector<8x8xf32> to vector<8xf32>
    %129 = vector.shape_cast %128 : vector<8xf32> to vector<8x1xf32>
    %130 = tpu.reciprocal %129 {approx = true} : vector<8x1xf32> -> vector<8x1xf32>
    %131 = vector.broadcast %130 : vector<8x1xf32> to vector<8x8xf32>
    %132 = arith.mulf %127, %131 : vector<8x8xf32>
    %cst_39 = arith.constant dense<0.000000e+00> : vector<8x16xf32>
    %133 = tpu.matmul %132, %49, %cst_39 {dimension_numbers = #tpu.dot_dimension_numbers<[1], [0], [0], [1], [0, 0, 1, 1], [], []>} : vector<8x8xf32>, vector<8x16xf32>, vector<8x16xf32> -> vector<8x16xf32>
    %134 = vector.extract_strided_slice %6 {offsets = [0, 16], sizes = [8, 16], strides = [1, 1]} : vector<8x128xf32> to vector<8x16xf32>
    %135 = vector.extract_strided_slice %11 {offsets = [1, 0], sizes = [1, 16], strides = [1, 1]} : vector<4x16xf32> to vector<1x16xf32>
    %cst_40 = arith.constant dense<0.000000e+00> : vector<8xf32>
    %136 = vector.multi_reduction <add>, %134, %cst_40 [1] : vector<8x16xf32> to vector<8xf32>
    %137 = vector.shape_cast %136 : vector<8xf32> to vector<8x1xf32>
    %cst_41 = arith.constant 1.600000e+01 : f32
    %138 = vector.broadcast %cst_41 : f32 to vector<8x1xf32>
    %139 = arith.divf %137, %138 : vector<8x1xf32>
    %140 = vector.broadcast %139 : vector<8x1xf32> to vector<8x16xf32>
    %141 = arith.subf %134, %140 : vector<8x16xf32>
    %142 = arith.mulf %141, %141 : vector<8x16xf32>
    %cst_42 = arith.constant dense<0.000000e+00> : vector<8xf32>
    %143 = vector.multi_reduction <add>, %142, %cst_42 [1] : vector<8x16xf32> to vector<8xf32>
    %144 = vector.shape_cast %143 : vector<8xf32> to vector<8x1xf32>
    %cst_43 = arith.constant 1.600000e+01 : f32
    %145 = vector.broadcast %cst_43 : f32 to vector<8x1xf32>
    %146 = arith.divf %144, %145 : vector<8x1xf32>
    %147 = vector.broadcast %139 : vector<8x1xf32> to vector<8x16xf32>
    %148 = arith.subf %134, %147 : vector<8x16xf32>
    %cst_44 = arith.constant 9.99999974E-6 : f32
    %149 = vector.broadcast %cst_44 : f32 to vector<8x1xf32>
    %150 = arith.addf %146, %149 : vector<8x1xf32>
    %151 = math.rsqrt %150 : vector<8x1xf32>
    %152 = vector.broadcast %151 : vector<8x1xf32> to vector<8x16xf32>
    %153 = arith.mulf %148, %152 : vector<8x16xf32>
    %154 = vector.broadcast %135 : vector<1x16xf32> to vector<8x16xf32>
    %155 = arith.mulf %153, %154 : vector<8x16xf32>
    %156 = vector.extract_strided_slice %155 {offsets = [0, 0], sizes = [8, 4], strides = [1, 1]} : vector<8x16xf32> to vector<8x4xf32>
    %157 = vector.extract_strided_slice %155 {offsets = [0, 4], sizes = [8, 12], strides = [1, 1]} : vector<8x16xf32> to vector<8x12xf32>
    %158 = vector.extract_strided_slice %156 {offsets = [0, 2], sizes = [8, 2], strides = [1, 1]} : vector<8x4xf32> to vector<8x2xf32>
    %cst_45 = arith.constant 0.000000e+00 : f32
    %159 = vector.broadcast %cst_45 : f32 to vector<8x2xf32>
    %160 = arith.subf %159, %158 : vector<8x2xf32>
    %161 = vector.extract_strided_slice %156 {offsets = [0, 0], sizes = [8, 2], strides = [1, 1]} : vector<8x4xf32> to vector<8x2xf32>
    %162 = tpu.concatenate %160, %161 in 1 : vector<8x2xf32>, vector<8x2xf32> -> vector<8x4xf32>
    %163 = arith.mulf %156, %8 : vector<8x4xf32>
    %164 = arith.mulf %162, %10 : vector<8x4xf32>
    %165 = arith.addf %163, %164 : vector<8x4xf32>
    %166 = tpu.concatenate %165, %157 in 1 : vector<8x4xf32>, vector<8x12xf32> -> vector<8x16xf32>
    %cst_46 = arith.constant 2.500000e-01 : f32
    %167 = vector.broadcast %cst_46 : f32 to vector<8x16xf32>
    %168 = arith.mulf %166, %167 : vector<8x16xf32>
    %169 = tpu.transpose %48, [1, 0] : vector<8x16xf32> -> vector<16x8xf32>
    %cst_47 = arith.constant dense<0.000000e+00> : vector<8x8xf32>
    %170 = tpu.matmul %168, %169, %cst_47 {dimension_numbers = #tpu.dot_dimension_numbers<[1], [0], [0], [1], [0, 0, 1, 1], [], []>} : vector<8x16xf32>, vector<16x8xf32>, vector<8x8xf32> -> vector<8x8xf32>
    %cst_48 = arith.constant -1.000000e+30 : f32
    %171 = vector.broadcast %cst_48 : f32 to vector<8x8xf32>
    %172 = arith.select %15, %170, %171 : vector<8x8xi1>, vector<8x8xf32>
    %cst_49 = arith.constant dense<0xFF800000> : vector<8xf32>
    %173 = vector.multi_reduction <maximumf>, %172, %cst_49 [1] : vector<8x8xf32> to vector<8xf32>
    %174 = vector.shape_cast %173 : vector<8xf32> to vector<8x1xf32>
    %175 = vector.broadcast %174 : vector<8x1xf32> to vector<8x8xf32>
    %176 = arith.subf %172, %175 : vector<8x8xf32>
    %177 = math.exp %176 : vector<8x8xf32>
    %cst_50 = arith.constant dense<0.000000e+00> : vector<8xf32>
    %178 = vector.multi_reduction <add>, %177, %cst_50 [1] : vector<8x8xf32> to vector<8xf32>
    %179 = vector.shape_cast %178 : vector<8xf32> to vector<8x1xf32>
    %180 = tpu.reciprocal %179 {approx = true} : vector<8x1xf32> -> vector<8x1xf32>
    %181 = vector.broadcast %180 : vector<8x1xf32> to vector<8x8xf32>
    %182 = arith.mulf %177, %181 : vector<8x8xf32>
    %cst_51 = arith.constant dense<0.000000e+00> : vector<8x16xf32>
    %183 = tpu.matmul %182, %49, %cst_51 {dimension_numbers = #tpu.dot_dimension_numbers<[1], [0], [0], [1], [0, 0, 1, 1], [], []>} : vector<8x8xf32>, vector<8x16xf32>, vector<8x16xf32> -> vector<8x16xf32>
    %184 = vector.extract_strided_slice %6 {offsets = [0, 32], sizes = [8, 16], strides = [1, 1]} : vector<8x128xf32> to vector<8x16xf32>
    %185 = vector.extract_strided_slice %11 {offsets = [2, 0], sizes = [1, 16], strides = [1, 1]} : vector<4x16xf32> to vector<1x16xf32>
    %cst_52 = arith.constant dense<0.000000e+00> : vector<8xf32>
    %186 = vector.multi_reduction <add>, %184, %cst_52 [1] : vector<8x16xf32> to vector<8xf32>
    %187 = vector.shape_cast %186 : vector<8xf32> to vector<8x1xf32>
    %cst_53 = arith.constant 1.600000e+01 : f32
    %188 = vector.broadcast %cst_53 : f32 to vector<8x1xf32>
    %189 = arith.divf %187, %188 : vector<8x1xf32>
    %190 = vector.broadcast %189 : vector<8x1xf32> to vector<8x16xf32>
    %191 = arith.subf %184, %190 : vector<8x16xf32>
    %192 = arith.mulf %191, %191 : vector<8x16xf32>
    %cst_54 = arith.constant dense<0.000000e+00> : vector<8xf32>
    %193 = vector.multi_reduction <add>, %192, %cst_54 [1] : vector<8x16xf32> to vector<8xf32>
    %194 = vector.shape_cast %193 : vector<8xf32> to vector<8x1xf32>
    %cst_55 = arith.constant 1.600000e+01 : f32
    %195 = vector.broadcast %cst_55 : f32 to vector<8x1xf32>
    %196 = arith.divf %194, %195 : vector<8x1xf32>
    %197 = vector.broadcast %189 : vector<8x1xf32> to vector<8x16xf32>
    %198 = arith.subf %184, %197 : vector<8x16xf32>
    %cst_56 = arith.constant 9.99999974E-6 : f32
    %199 = vector.broadcast %cst_56 : f32 to vector<8x1xf32>
    %200 = arith.addf %196, %199 : vector<8x1xf32>
    %201 = math.rsqrt %200 : vector<8x1xf32>
    %202 = vector.broadcast %201 : vector<8x1xf32> to vector<8x16xf32>
    %203 = arith.mulf %198, %202 : vector<8x16xf32>
    %204 = vector.broadcast %185 : vector<1x16xf32> to vector<8x16xf32>
    %205 = arith.mulf %203, %204 : vector<8x16xf32>
    %206 = vector.extract_strided_slice %205 {offsets = [0, 0], sizes = [8, 4], strides = [1, 1]} : vector<8x16xf32> to vector<8x4xf32>
    %207 = vector.extract_strided_slice %205 {offsets = [0, 4], sizes = [8, 12], strides = [1, 1]} : vector<8x16xf32> to vector<8x12xf32>
    %208 = vector.extract_strided_slice %206 {offsets = [0, 2], sizes = [8, 2], strides = [1, 1]} : vector<8x4xf32> to vector<8x2xf32>
    %cst_57 = arith.constant 0.000000e+00 : f32
    %209 = vector.broadcast %cst_57 : f32 to vector<8x2xf32>
    %210 = arith.subf %209, %208 : vector<8x2xf32>
    %211 = vector.extract_strided_slice %206 {offsets = [0, 0], sizes = [8, 2], strides = [1, 1]} : vector<8x4xf32> to vector<8x2xf32>
    %212 = tpu.concatenate %210, %211 in 1 : vector<8x2xf32>, vector<8x2xf32> -> vector<8x4xf32>
    %213 = arith.mulf %206, %8 : vector<8x4xf32>
    %214 = arith.mulf %212, %10 : vector<8x4xf32>
    %215 = arith.addf %213, %214 : vector<8x4xf32>
    %216 = tpu.concatenate %215, %207 in 1 : vector<8x4xf32>, vector<8x12xf32> -> vector<8x16xf32>
    %cst_58 = arith.constant 2.500000e-01 : f32
    %217 = vector.broadcast %cst_58 : f32 to vector<8x16xf32>
    %218 = arith.mulf %216, %217 : vector<8x16xf32>
    %219 = tpu.transpose %82, [1, 0] : vector<8x16xf32> -> vector<16x8xf32>
    %cst_59 = arith.constant dense<0.000000e+00> : vector<8x8xf32>
    %220 = tpu.matmul %218, %219, %cst_59 {dimension_numbers = #tpu.dot_dimension_numbers<[1], [0], [0], [1], [0, 0, 1, 1], [], []>} : vector<8x16xf32>, vector<16x8xf32>, vector<8x8xf32> -> vector<8x8xf32>
    %cst_60 = arith.constant -1.000000e+30 : f32
    %221 = vector.broadcast %cst_60 : f32 to vector<8x8xf32>
    %222 = arith.select %15, %220, %221 : vector<8x8xi1>, vector<8x8xf32>
    %cst_61 = arith.constant dense<0xFF800000> : vector<8xf32>
    %223 = vector.multi_reduction <maximumf>, %222, %cst_61 [1] : vector<8x8xf32> to vector<8xf32>
    %224 = vector.shape_cast %223 : vector<8xf32> to vector<8x1xf32>
    %225 = vector.broadcast %224 : vector<8x1xf32> to vector<8x8xf32>
    %226 = arith.subf %222, %225 : vector<8x8xf32>
    %227 = math.exp %226 : vector<8x8xf32>
    %cst_62 = arith.constant dense<0.000000e+00> : vector<8xf32>
    %228 = vector.multi_reduction <add>, %227, %cst_62 [1] : vector<8x8xf32> to vector<8xf32>
    %229 = vector.shape_cast %228 : vector<8xf32> to vector<8x1xf32>
    %230 = tpu.reciprocal %229 {approx = true} : vector<8x1xf32> -> vector<8x1xf32>
    %231 = vector.broadcast %230 : vector<8x1xf32> to vector<8x8xf32>
    %232 = arith.mulf %227, %231 : vector<8x8xf32>
    %cst_63 = arith.constant dense<0.000000e+00> : vector<8x16xf32>
    %233 = tpu.matmul %232, %83, %cst_63 {dimension_numbers = #tpu.dot_dimension_numbers<[1], [0], [0], [1], [0, 0, 1, 1], [], []>} : vector<8x8xf32>, vector<8x16xf32>, vector<8x16xf32> -> vector<8x16xf32>
    %234 = vector.extract_strided_slice %6 {offsets = [0, 48], sizes = [8, 16], strides = [1, 1]} : vector<8x128xf32> to vector<8x16xf32>
    %235 = vector.extract_strided_slice %11 {offsets = [3, 0], sizes = [1, 16], strides = [1, 1]} : vector<4x16xf32> to vector<1x16xf32>
    %cst_64 = arith.constant dense<0.000000e+00> : vector<8xf32>
    %236 = vector.multi_reduction <add>, %234, %cst_64 [1] : vector<8x16xf32> to vector<8xf32>
    %237 = vector.shape_cast %236 : vector<8xf32> to vector<8x1xf32>
    %cst_65 = arith.constant 1.600000e+01 : f32
    %238 = vector.broadcast %cst_65 : f32 to vector<8x1xf32>
    %239 = arith.divf %237, %238 : vector<8x1xf32>
    %240 = vector.broadcast %239 : vector<8x1xf32> to vector<8x16xf32>
    %241 = arith.subf %234, %240 : vector<8x16xf32>
    %242 = arith.mulf %241, %241 : vector<8x16xf32>
    %cst_66 = arith.constant dense<0.000000e+00> : vector<8xf32>
    %243 = vector.multi_reduction <add>, %242, %cst_66 [1] : vector<8x16xf32> to vector<8xf32>
    %244 = vector.shape_cast %243 : vector<8xf32> to vector<8x1xf32>
    %cst_67 = arith.constant 1.600000e+01 : f32
    %245 = vector.broadcast %cst_67 : f32 to vector<8x1xf32>
    %246 = arith.divf %244, %245 : vector<8x1xf32>
    %247 = vector.broadcast %239 : vector<8x1xf32> to vector<8x16xf32>
    %248 = arith.subf %234, %247 : vector<8x16xf32>
    %cst_68 = arith.constant 9.99999974E-6 : f32
    %249 = vector.broadcast %cst_68 : f32 to vector<8x1xf32>
    %250 = arith.addf %246, %249 : vector<8x1xf32>
    %251 = math.rsqrt %250 : vector<8x1xf32>
    %252 = vector.broadcast %251 : vector<8x1xf32> to vector<8x16xf32>
    %253 = arith.mulf %248, %252 : vector<8x16xf32>
    %254 = vector.broadcast %235 : vector<1x16xf32> to vector<8x16xf32>
    %255 = arith.mulf %253, %254 : vector<8x16xf32>
    %256 = vector.extract_strided_slice %255 {offsets = [0, 0], sizes = [8, 4], strides = [1, 1]} : vector<8x16xf32> to vector<8x4xf32>
    %257 = vector.extract_strided_slice %255 {offsets = [0, 4], sizes = [8, 12], strides = [1, 1]} : vector<8x16xf32> to vector<8x12xf32>
    %258 = vector.extract_strided_slice %256 {offsets = [0, 2], sizes = [8, 2], strides = [1, 1]} : vector<8x4xf32> to vector<8x2xf32>
    %cst_69 = arith.constant 0.000000e+00 : f32
    %259 = vector.broadcast %cst_69 : f32 to vector<8x2xf32>
    %260 = arith.subf %259, %258 : vector<8x2xf32>
    %261 = vector.extract_strided_slice %256 {offsets = [0, 0], sizes = [8, 2], strides = [1, 1]} : vector<8x4xf32> to vector<8x2xf32>
    %262 = tpu.concatenate %260, %261 in 1 : vector<8x2xf32>, vector<8x2xf32> -> vector<8x4xf32>
    %263 = arith.mulf %256, %8 : vector<8x4xf32>
    %264 = arith.mulf %262, %10 : vector<8x4xf32>
    %265 = arith.addf %263, %264 : vector<8x4xf32>
    %266 = tpu.concatenate %265, %257 in 1 : vector<8x4xf32>, vector<8x12xf32> -> vector<8x16xf32>
    %cst_70 = arith.constant 2.500000e-01 : f32
    %267 = vector.broadcast %cst_70 : f32 to vector<8x16xf32>
    %268 = arith.mulf %266, %267 : vector<8x16xf32>
    %269 = tpu.transpose %82, [1, 0] : vector<8x16xf32> -> vector<16x8xf32>
    %cst_71 = arith.constant dense<0.000000e+00> : vector<8x8xf32>
    %270 = tpu.matmul %268, %269, %cst_71 {dimension_numbers = #tpu.dot_dimension_numbers<[1], [0], [0], [1], [0, 0, 1, 1], [], []>} : vector<8x16xf32>, vector<16x8xf32>, vector<8x8xf32> -> vector<8x8xf32>
    %cst_72 = arith.constant -1.000000e+30 : f32
    %271 = vector.broadcast %cst_72 : f32 to vector<8x8xf32>
    %272 = arith.select %15, %270, %271 : vector<8x8xi1>, vector<8x8xf32>
    %cst_73 = arith.constant dense<0xFF800000> : vector<8xf32>
    %273 = vector.multi_reduction <maximumf>, %272, %cst_73 [1] : vector<8x8xf32> to vector<8xf32>
    %274 = vector.shape_cast %273 : vector<8xf32> to vector<8x1xf32>
    %275 = vector.broadcast %274 : vector<8x1xf32> to vector<8x8xf32>
    %276 = arith.subf %272, %275 : vector<8x8xf32>
    %277 = math.exp %276 : vector<8x8xf32>
    %cst_74 = arith.constant dense<0.000000e+00> : vector<8xf32>
    %278 = vector.multi_reduction <add>, %277, %cst_74 [1] : vector<8x8xf32> to vector<8xf32>
    %279 = vector.shape_cast %278 : vector<8xf32> to vector<8x1xf32>
    %280 = tpu.reciprocal %279 {approx = true} : vector<8x1xf32> -> vector<8x1xf32>
    %281 = vector.broadcast %280 : vector<8x1xf32> to vector<8x8xf32>
    %282 = arith.mulf %277, %281 : vector<8x8xf32>
    %cst_75 = arith.constant dense<0.000000e+00> : vector<8x16xf32>
    %283 = tpu.matmul %282, %83, %cst_75 {dimension_numbers = #tpu.dot_dimension_numbers<[1], [0], [0], [1], [0, 0, 1, 1], [], []>} : vector<8x8xf32>, vector<8x16xf32>, vector<8x16xf32> -> vector<8x16xf32>
    %284 = tpu.concatenate %133, %183, %233, %283 in 1 : vector<8x16xf32>, vector<8x16xf32>, vector<8x16xf32>, vector<8x16xf32> -> vector<8x64xf32>
    %c0_76 = arith.constant 0 : index
    %c0_77 = arith.constant 0 : index
    %285 = vector.load %arg4[%c0_76, %c0_77] : memref<64x64xf32, #tpu.memory_space<vmem>>, vector<64x64xf32>
    %cst_78 = arith.constant dense<0.000000e+00> : vector<8x64xf32>
    %286 = tpu.matmul %284, %285, %cst_78 {dimension_numbers = #tpu.dot_dimension_numbers<[1], [0], [0], [1], [0, 0, 1, 1], [], []>} : vector<8x64xf32>, vector<64x64xf32>, vector<8x64xf32> -> vector<8x64xf32>
    %c0_79 = arith.constant 0 : index
    %c0_80 = arith.constant 0 : index
    %c0_81 = arith.constant 0 : index
    %287 = vector.load %arg9[%c0_79, %c0_80, %c0_81] : memref<1x8x64xf32, #tpu.memory_space<vmem>>, vector<1x8x64xf32>
    %288 = vector.shape_cast %287 : vector<1x8x64xf32> to vector<8x64xf32>
    %289 = vector.shape_cast %286 : vector<8x64xf32> to vector<1x8x64xf32>
    tpu.vector_store %arg9[%c0_79, %c0_80, %c0_81], %289 {strides = array<i32>} : memref<1x8x64xf32, #tpu.memory_space<vmem>>, vector<1x8x64xf32>,
    return
  }
  func.func @transform_0(%arg0: i32) -> (i32, i32, i32) {
    %c0_i32 = arith.constant 0 : i32
    %c0_i32_0 = arith.constant 0 : i32
    %c0_i32_1 = arith.constant 0 : i32
    return %arg0, %c0_i32, %c0_i32_0 : i32, i32, i32
  }
  func.func @transform_1(%arg0: i32) -> (i32, i32) {
    %c0_i32 = arith.constant 0 : i32
    %c0_i32_0 = arith.constant 0 : i32
    %c0_i32_1 = arith.constant 0 : i32
    return %c0_i32, %c0_i32_0 : i32, i32
  }
  func.func @transform_2(%arg0: i32) -> (i32, i32) {
    %c0_i32 = arith.constant 0 : i32
    %c0_i32_0 = arith.constant 0 : i32
    %c0_i32_1 = arith.constant 0 : i32
    return %c0_i32, %c0_i32_0 : i32, i32
  }
  func.func @transform_3(%arg0: i32) -> (i32, i32) {
    %c0_i32 = arith.constant 0 : i32
    %c0_i32_0 = arith.constant 0 : i32
    %c0_i32_1 = arith.constant 0 : i32
    return %c0_i32, %c0_i32_0 : i32, i32
  }
  func.func @transform_4(%arg0: i32) -> (i32, i32) {
    %c0_i32 = arith.constant 0 : i32
    %c0_i32_0 = arith.constant 0 : i32
    %c0_i32_1 = arith.constant 0 : i32
    return %c0_i32, %c0_i32_0 : i32, i32
  }
  func.func @transform_5(%arg0: i32) -> (i32, i32) {
    %c0_i32 = arith.constant 0 : i32
    %c0_i32_0 = arith.constant 0 : i32
    %c0_i32_1 = arith.constant 0 : i32
    return %c0_i32, %c0_i32_0 : i32, i32
  }
  func.func @transform_6(%arg0: i32) -> (i32, i32, i32) {
    %c0_i32 = arith.constant 0 : i32
    %c0_i32_0 = arith.constant 0 : i32
    %c0_i32_1 = arith.constant 0 : i32
    return %arg0, %c0_i32, %c0_i32_0 : i32, i32, i32
  }
  func.func @transform_7(%arg0: i32) -> (i32, i32, i32) {
    %c0_i32 = arith.constant 0 : i32
    %c0_i32_0 = arith.constant 0 : i32
    %c0_i32_1 = arith.constant 0 : i32
    return %arg0, %c0_i32, %c0_i32_0 : i32, i32, i32
  }
  func.func @transform_8(%arg0: i32) -> (i32, i32, i32) {
    %c0_i32 = arith.constant 0 : i32
    %c0_i32_0 = arith.constant 0 : i32
    %c0_i32_1 = arith.constant 0 : i32
    return %arg0, %c0_i32, %c0_i32_0 : i32, i32, i32
  }
}

</mosaic_0001>

<llo_original>
// kernel: stablelm_attention_forward.1
$region0: #{stablelm_attention_forward.1}
  #allocation0 [shape = 'u32[]', space=smem, size = 0x4, offset = 0x4, fixed_abs, tag = 'smem constant byte address 0x4 - core index']
  #allocation1 [shape = 'u32[144,128]{1,0:T(1,128)}', space=vmem, size = 0x12000, scoped, tag = 'internal scratch']
  %s0 = inlined_call_operand.vmem [shape: f32[2,8,64], index: 0, kind: input, shape index: {}]
  %s1 = inlined_call_operand.vmem [shape: f32[64,128], index: 1, kind: input, shape index: {}]
  %s2 = inlined_call_operand.vmem [shape: f32[1,128], index: 2, kind: input, shape index: {}]
  %s3 = inlined_call_operand.vmem [shape: f32[64,64], index: 3, kind: input, shape index: {}]
  %s4 = inlined_call_operand.vmem [shape: f32[4,16], index: 4, kind: input, shape index: {}]
  %s5 = inlined_call_operand.vmem [shape: f32[2,16], index: 5, kind: input, shape index: {}]
  %s6 = inlined_call_operand.vmem [shape: f32[2,8,4], index: 6, kind: input, shape index: {}]
  %s7 = inlined_call_operand.vmem [shape: f32[2,8,4], index: 7, kind: input, shape index: {}]
  %s8 = inlined_call_operand.hbm [shape: f32[2,8,64], index: 8, kind: output, shape index: {}]
  %s9 = sld [smem:[#allocation0]]
  $region65: #{stablelm_attention_forward.1} parent=0
    _
  %s11 = ssub.s32 1, %s9
  %s12 = scalar_select 0, %s11, %s9
  $region1: #{stablelm_attention_forward.1} parent=0
    #allocation2 [shape = 'u8[8192]{0}', space=vmem, size = 0x2000, scoped, tag = 'output window, operand 0']
    #allocation3 [shape = 's32[2]{0}', space=sflag, size = 0x8, scoped, tag = 'scoped memory for stablelm_attention_forward.1']
    %13 = vsyncpa [#allocation3], 0
    %s14 = scalar_lea.sflag [#allocation3], 1
    %15 = vsyncpa %s14, 0
    loop: start=0, step=1, limit=4
    $region2: #{stablelm_attention_forward.1} parent=1 // loop_pre_header
      _
    $region3: #{stablelm_attention_forward.1} parent=1 // loop_header
      %s17 = sphi 0, %s21
      %p18 = scmp.ge.s32.totalorder %s17, 4
      %s27 = sphi 0, %s29
      %s30 = sphi 0, %s27
      %s31 = sphi 0, %s30
      %s47 = sphi 0, %s31
      %s51 = sphi 0, %s51
      %s53 = sphi 0, %s51
      %s54 = sphi 0, %s53
      %s68 = sphi 0, %s54
      %s72 = sphi 0, %s72
      %s74 = sphi 0, %s72
      %s75 = sphi 0, %s74
      %s89 = sphi 0, %s75
      %s93 = sphi 0, %s93
      %s95 = sphi 0, %s93
      %s96 = sphi 0, %s95
      %s110 = sphi 0, %s96
      %s114 = sphi 0, %s114
      %s116 = sphi 0, %s114
      %s117 = sphi 0, %s116
      %s131 = sphi 0, %s117
      %s135 = sphi 0, %s135
      %s137 = sphi 0, %s135
      %s138 = sphi 0, %s137
      %s152 = sphi 0, %s138
      %s158 = sphi 0, %s160
      %s161 = sphi 0, %s158
      %s162 = sphi 0, %s161
      %s178 = sphi 0, %s162
      %s184 = sphi 0, %s186
      %s187 = sphi 0, %s184
      %s188 = sphi 0, %s187
      %s204 = sphi 0, %s188
      %s210 = sphi 0, %s212
      %s213 = sphi 0, %s210
      %s214 = sphi 0, %s213
      %s230 = sphi 0, %s214
    $region4: #{stablelm_attention_forward.1} parent=1 // loop_header_branch
      %20 = sbr.rel (%p18) target = $region8
    $region5: #{stablelm_attention_forward.1} parent=1 // loop_body
      %s22 = ssub.s32 %s17, 1
      %s23 = ssub.s32 %s17, 2
      %s24 = sadd.s32 %s17, 1
      %s25 = ssub.s32 %s17, %s24
      %p26 = scmp.eq.s32.totalorder %s25, 0
      %s28 = sadd.s32 %s27, 1
      %s29 = scalar_select %p26, %s27, %s28
      %p32 = pneg %p26
      %p33 = scmp.eq.s32.totalorder %s17, 1
      %p34 = por %p32, %p33
      %p35 = scmp.ne.s32.totalorder %s27, %s30
      %p36 = scmp.eq.s32.totalorder %s17, 0
      %p37 = por %p35, %p36
      %p38 = scmp.ne.s32.totalorder %s27, %s30
      %p39 = scmp.eq.s32.totalorder %s22, 1
      %p40 = por %p38, %p39
      %p41 = scmp.ne.s32.totalorder %s30, %s31
      %p42 = scmp.eq.s32.totalorder %s22, 0
      %p43 = por %p41, %p42
      %p44 = scmp.ne.s32.totalorder %s30, %s31
      %p45 = scmp.eq.s32.totalorder %s23, 1
      %p46 = por %p44, %p45
      %p48 = scmp.ne.s32.totalorder %s31, %s47
      %p49 = scmp.eq.s32.totalorder %s23, 0
      %p50 = por %p48, %p49
      %s52 = sadd.s32 %s51, 1
      %p55 = scmp.eq.s32.totalorder %s17, 1
      %p56 = scmp.ne.s32.totalorder %s51, %s53
      %p57 = scmp.eq.s32.totalorder %s17, 0
      %p58 = por %p56, %p57
      %p59 = scmp.ne.s32.totalorder %s51, %s53
      %p60 = scmp.eq.s32.totalorder %s22, 1
      %p61 = por %p59, %p60
      %p62 = scmp.ne.s32.totalorder %s53, %s54
      %p63 = scmp.eq.s32.totalorder %s22, 0
      %p64 = por %p62, %p63
      %p65 = scmp.ne.s32.totalorder %s53, %s54
      %p66 = scmp.eq.s32.totalorder %s23, 1
      %p67 = por %p65, %p66
      %p69 = scmp.ne.s32.totalorder %s54, %s68
      %p70 = scmp.eq.s32.totalorder %s23, 0
      %p71 = por %p69, %p70
      %s73 = sadd.s32 %s72, 1
      %p76 = scmp.eq.s32.totalorder %s17, 1
      %p77 = scmp.ne.s32.totalorder %s72, %s74
      %p78 = scmp.eq.s32.totalorder %s17, 0
      %p79 = por %p77, %p78
      %p80 = scmp.ne.s32.totalorder %s72, %s74
      %p81 = scmp.eq.s32.totalorder %s22, 1
      %p82 = por %p80, %p81
      %p83 = scmp.ne.s32.totalorder %s74, %s75
      %p84 = scmp.eq.s32.totalorder %s22, 0
      %p85 = por %p83, %p84
      %p86 = scmp.ne.s32.totalorder %s74, %s75
      %p87 = scmp.eq.s32.totalorder %s23, 1
      %p88 = por %p86, %p87
      %p90 = scmp.ne.s32.totalorder %s75, %s89
      %p91 = scmp.eq.s32.totalorder %s23, 0
      %p92 = por %p90, %p91
      %s94 = sadd.s32 %s93, 1
      %p97 = scmp.eq.s32.totalorder %s17, 1
      %p98 = scmp.ne.s32.totalorder %s93, %s95
      %p99 = scmp.eq.s32.totalorder %s17, 0
      %p100 = por %p98, %p99
      %p101 = scmp.ne.s32.totalorder %s93, %s95
      %p102 = scmp.eq.s32.totalorder %s22, 1
      %p103 = por %p101, %p102
      %p104 = scmp.ne.s32.totalorder %s95, %s96
      %p105 = scmp.eq.s32.totalorder %s22, 0
      %p106 = por %p104, %p105
      %p107 = scmp.ne.s32.totalorder %s95, %s96
      %p108 = scmp.eq.s32.totalorder %s23, 1
      %p109 = por %p107, %p108
      %p111 = scmp.ne.s32.totalorder %s96, %s110
      %p112 = scmp.eq.s32.totalorder %s23, 0
      %p113 = por %p111, %p112
      %s115 = sadd.s32 %s114, 1
      %p118 = scmp.eq.s32.totalorder %s17, 1
      %p119 = scmp.ne.s32.totalorder %s114, %s116
      %p120 = scmp.eq.s32.totalorder %s17, 0
      %p121 = por %p119, %p120
      %p122 = scmp.ne.s32.totalorder %s114, %s116
      %p123 = scmp.eq.s32.totalorder %s22, 1
      %p124 = por %p122, %p123
      %p125 = scmp.ne.s32.totalorder %s116, %s117
      %p126 = scmp.eq.s32.totalorder %s22, 0
      %p127 = por %p125, %p126
      %p128 = scmp.ne.s32.totalorder %s116, %s117
      %p129 = scmp.eq.s32.totalorder %s23, 1
      %p130 = por %p128, %p129
      %p132 = scmp.ne.s32.totalorder %s117, %s131
      %p133 = scmp.eq.s32.totalorder %s23, 0
      %p134 = por %p132, %p133
      %s136 = sadd.s32 %s135, 1
      %p139 = scmp.eq.s32.totalorder %s17, 1
      %p140 = scmp.ne.s32.totalorder %s135, %s137
      %p141 = scmp.eq.s32.totalorder %s17, 0
      %p142 = por %p140, %p141
      %p143 = scmp.ne.s32.totalorder %s135, %s137
      %p144 = scmp.eq.s32.totalorder %s22, 1
      %p145 = por %p143, %p144
      %p146 = scmp.ne.s32.totalorder %s137, %s138
      %p147 = scmp.eq.s32.totalorder %s22, 0
      %p148 = por %p146, %p147
      %p149 = scmp.ne.s32.totalorder %s137, %s138
      %p150 = scmp.eq.s32.totalorder %s23, 1
      %p151 = por %p149, %p150
      %p153 = scmp.ne.s32.totalorder %s138, %s152
      %p154 = scmp.eq.s32.totalorder %s23, 0
      %p155 = por %p153, %p154
      %s156 = ssub.s32 %s17, %s24
      %p157 = scmp.eq.s32.totalorder %s156, 0
      %s159 = sadd.s32 %s158, 1
      %s160 = scalar_select %p157, %s158, %s159
      %p163 = pneg %p157
      %p164 = scmp.eq.s32.totalorder %s17, 1
      %p165 = por %p163, %p164
      %p166 = scmp.ne.s32.totalorder %s158, %s161
      %p167 = scmp.eq.s32.totalorder %s17, 0
      %p168 = por %p166, %p167
      %p169 = scmp.ne.s32.totalorder %s158, %s161
      %p170 = scmp.eq.s32.totalorder %s22, 1
      %p171 = por %p169, %p170
      %p172 = scmp.ne.s32.totalorder %s161, %s162
      %p173 = scmp.eq.s32.totalorder %s22, 0
      %p174 = por %p172, %p173
      %p175 = scmp.ne.s32.totalorder %s161, %s162
      %p176 = scmp.eq.s32.totalorder %s23, 1
      %p177 = por %p175, %p176
      %p179 = scmp.ne.s32.totalorder %s162, %s178
      %p180 = scmp.eq.s32.totalorder %s23, 0
      %p181 = por %p179, %p180
      %s182 = ssub.s32 %s17, %s24
      %p183 = scmp.eq.s32.totalorder %s182, 0
      %s185 = sadd.s32 %s184, 1
      %s186 = scalar_select %p183, %s184, %s185
      %p189 = pneg %p183
      %p190 = scmp.eq.s32.totalorder %s17, 1
      %p191 = por %p189, %p190
      %p192 = scmp.ne.s32.totalorder %s184, %s187
      %p193 = scmp.eq.s32.totalorder %s17, 0
      %p194 = por %p192, %p193
      %p195 = scmp.ne.s32.totalorder %s184, %s187
      %p196 = scmp.eq.s32.totalorder %s22, 1
      %p197 = por %p195, %p196
      %p198 = scmp.ne.s32.totalorder %s187, %s188
      %p199 = scmp.eq.s32.totalorder %s22, 0
      %p200 = por %p198, %p199
      %p201 = scmp.ne.s32.totalorder %s187, %s188
      %p202 = scmp.eq.s32.totalorder %s23, 1
      %p203 = por %p201, %p202
      %p205 = scmp.ne.s32.totalorder %s188, %s204
      %p206 = scmp.eq.s32.totalorder %s23, 0
      %p207 = por %p205, %p206
      %s208 = ssub.s32 %s17, %s24
      %p209 = scmp.eq.s32.totalorder %s208, 0
      %s211 = sadd.s32 %s210, 1
      %s212 = scalar_select %p209, %s210, %s211
      %p215 = pneg %p209
      %p216 = scmp.eq.s32.totalorder %s17, 1
      %p217 = por %p215, %p216
      %p218 = scmp.ne.s32.totalorder %s210, %s213
      %p219 = scmp.eq.s32.totalorder %s17, 0
      %p220 = por %p218, %p219
      %p221 = scmp.ne.s32.totalorder %s210, %s213
      %p222 = scmp.eq.s32.totalorder %s22, 1
      %p223 = por %p221, %p222
      %p224 = scmp.ne.s32.totalorder %s213, %s214
      %p225 = scmp.eq.s32.totalorder %s22, 0
      %p226 = por %p224, %p225
      %p227 = scmp.ne.s32.totalorder %s213, %s214
      %p228 = scmp.eq.s32.totalorder %s23, 1
      %p229 = por %p227, %p228
      %p231 = scmp.ne.s32.totalorder %s214, %s230
      %p232 = scmp.eq.s32.totalorder %s23, 0
      %p233 = por %p231, %p232
      %p234 = scmp.le.s32.totalorder 1, %s17
      %p235 = scmp.lt.s32.totalorder %s17, 3
      %p236 = pnand %p234, %p235
      %p237 = pneg %p236
      // Predicated region
      $region9: #{stablelm_attention_forward.1} parent=5 // pred_check
        _
      $region10: #{stablelm_attention_forward.1} parent=5 // pred_check_branch
        %239 = sbr.rel (%p236) target = $region12
      $region11: #{stablelm_attention_forward.1} parent=5 // pred_region
        %s240 = ssub.s32 %s17, 1
        // Predicated region
        $region13: #{stablelm_attention_forward.1} parent=11 // pred_check
          %p241 = pneg %p64
        $region14: #{stablelm_attention_forward.1} parent=11 // pred_check_branch
          %243 = sbr.rel (%p241) target = $region16
        $region15: #{stablelm_attention_forward.1} parent=11 // pred_region
          _
        $region16: #{stablelm_attention_forward.1} parent=11 // pred_fallthru
          _
        // Predicated region
        $region17: #{stablelm_attention_forward.1} parent=11 // pred_check
          %p244 = pneg %p85
        $region18: #{stablelm_attention_forward.1} parent=11 // pred_check_branch
          %246 = sbr.rel (%p244) target = $region20
        $region19: #{stablelm_attention_forward.1} parent=11 // pred_region
          _
        $region20: #{stablelm_attention_forward.1} parent=11 // pred_fallthru
          _
        // Predicated region
        $region21: #{stablelm_attention_forward.1} parent=11 // pred_check
          %p247 = pneg %p106
        $region22: #{stablelm_attention_forward.1} parent=11 // pred_check_branch
          %249 = sbr.rel (%p247) target = $region24
        $region23: #{stablelm_attention_forward.1} parent=11 // pred_region
          _
        $region24: #{stablelm_attention_forward.1} parent=11 // pred_fallthru
          _
        // Predicated region
        $region25: #{stablelm_attention_forward.1} parent=11 // pred_check
          %p250 = pneg %p127
        $region26: #{stablelm_attention_forward.1} parent=11 // pred_check_branch
          %252 = sbr.rel (%p250) target = $region28
        $region27: #{stablelm_attention_forward.1} parent=11 // pred_region
          _
        $region28: #{stablelm_attention_forward.1} parent=11 // pred_fallthru
          _
        // Predicated region
        $region29: #{stablelm_attention_forward.1} parent=11 // pred_check
          %p253 = pneg %p148
        $region30: #{stablelm_attention_forward.1} parent=11 // pred_check_branch
          %255 = sbr.rel (%p253) target = $region32
        $region31: #{stablelm_attention_forward.1} parent=11 // pred_region
          _
        $region32: #{stablelm_attention_forward.1} parent=11 // pred_fallthru
          _
      $region12: #{stablelm_attention_forward.1} parent=5 // pred_fallthru
        _
      %p256 = scmp.lt.s32.totalorder %s17, 2
      // Predicated region
      $region33: #{stablelm_attention_forward.1} parent=5 // pred_check
        %p257 = pneg %p256
      $region34: #{stablelm_attention_forward.1} parent=5 // pred_check_branch
        %259 = sbr.rel (%p257) target = $region36
      $region35: #{stablelm_attention_forward.1} parent=5 // pred_region
        // Predicated region
        $region37: #{stablelm_attention_forward.1} parent=35 // pred_check
          %p260 = pneg %p37
        $region38: #{stablelm_attention_forward.1} parent=35 // pred_check_branch
          %262 = sbr.rel (%p260) target = $region40
        $region39: #{stablelm_attention_forward.1} parent=35 // pred_region
          %p263 = scmp.lt.s32.totalorder %s17, 1
          %s264 = scalar_select %p263, %s17, 1
          %s265 = smul.addr %s264, 8
          %s266 = scalar_lea.vmem %s0, %s265
        $region40: #{stablelm_attention_forward.1} parent=35 // pred_fallthru
          _
        // Predicated region
        $region41: #{stablelm_attention_forward.1} parent=35 // pred_check
          %p267 = pneg %p168
        $region42: #{stablelm_attention_forward.1} parent=35 // pred_check_branch
          %269 = sbr.rel (%p267) target = $region44
        $region43: #{stablelm_attention_forward.1} parent=35 // pred_region
          %p270 = scmp.lt.s32.totalorder %s17, 1
          %s271 = scalar_select %p270, %s17, 1
          %s272 = smul.addr %s271, 8
          %s273 = scalar_lea.vmem %s6, %s272
        $region44: #{stablelm_attention_forward.1} parent=35 // pred_fallthru
          _
        // Predicated region
        $region45: #{stablelm_attention_forward.1} parent=35 // pred_check
          %p274 = pneg %p194
        $region46: #{stablelm_attention_forward.1} parent=35 // pred_check_branch
          %276 = sbr.rel (%p274) target = $region48
        $region47: #{stablelm_attention_forward.1} parent=35 // pred_region
          %p277 = scmp.lt.s32.totalorder %s17, 1
          %s278 = scalar_select %p277, %s17, 1
          %s279 = smul.addr %s278, 8
          %s280 = scalar_lea.vmem %s7, %s279
        $region48: #{stablelm_attention_forward.1} parent=35 // pred_fallthru
          _
      $region36: #{stablelm_attention_forward.1} parent=5 // pred_fallthru
        _
      %p281 = scmp.le.s32.totalorder 1, %s17
      %p282 = scmp.lt.s32.totalorder %s17, 3
      %p283 = pnand %p281, %p282
      %p284 = pneg %p283
      // Predicated region
      $region49: #{stablelm_attention_forward.1} parent=5 // pred_check
        _
      $region50: #{stablelm_attention_forward.1} parent=5 // pred_check_branch
        %286 = sbr.rel (%p283) target = $region52
      $region51: #{stablelm_attention_forward.1} parent=5 // pred_region
        %s287 = ssub.s32 %s17, 1
        %p288 = scmp.lt.s32.totalorder %s22, 1
        %s289 = scalar_select %p288, %s22, 1
        %s290 = smul.addr %s289, 8
        %s291 = scalar_lea.vmem %s0, %s290
        %p292 = pneg %p43
        %p293 = pneg %p40
        %p294 = pneg %p64
        %p295 = pneg %p61
        %p296 = pneg %p85
        %p297 = pneg %p82
        %p298 = pneg %p106
        %p299 = pneg %p103
        %p300 = pneg %p127
        %p301 = pneg %p124
        %p302 = pneg %p148
        %p303 = pneg %p145
        %p304 = scmp.lt.s32.totalorder %s22, 1
        %s305 = scalar_select %p304, %s22, 1
        %s306 = smul.addr %s305, 8
        %s307 = scalar_lea.vmem %s6, %s306
        %p308 = pneg %p174
        %p309 = pneg %p171
        %p310 = scmp.lt.s32.totalorder %s22, 1
        %s311 = scalar_select %p310, %s22, 1
        %s312 = smul.addr %s311, 8
        %s313 = scalar_lea.vmem %s7, %s312
        %p314 = pneg %p200
        %p315 = pneg %p197
        %p316 = pneg %p226
        %p317 = pneg %p223
        %s318 = sand.u32 %s213, 1
        %s319 = scalar_lea.sflag [#allocation3], %s318
        %s320 = sand.u32 %s213, 1
        %s321 = smul.addr %s320, 8
        %s322 = scalar_lea.vmem [#allocation2], %s321
        %p323 = scmp.lt.s32.totalorder %s22, 1
        %s324 = scalar_select %p323, %s22, 1
        %s325 = smul.addr %s324, 8
        %s326 = scalar_lea.vmem %s0, %s325
        %p327 = scmp.lt.s32.totalorder %s22, 1
        %s328 = scalar_select %p327, %s22, 1
        %s329 = smul.addr %s328, 8
        %s330 = scalar_lea.vmem %s6, %s329
        %p331 = scmp.lt.s32.totalorder %s22, 1
        %s332 = scalar_select %p331, %s22, 1
        %s333 = smul.addr %s332, 8
        %s334 = scalar_lea.vmem %s7, %s333
        %v335 = vld [vmem:[%s326] sm:$0xff]
        %v336 = vld [vmem:[%s1] sm:$0xff]
        %v337 = vld [vmem:[%s1 + $0x8] sm:$0xff]
        %v338 = vld [vmem:[%s1 + $0x10] sm:$0xff]
        %v339 = vld [vmem:[%s1 + $0x18] sm:$0xff]
        %v340 = vld [vmem:[%s1 + $0x20] sm:$0xff]
        %v341 = vld [vmem:[%s1 + $0x28] sm:$0xff]
        %v342 = vld [vmem:[%s1 + $0x30] sm:$0xff]
        %v343 = vld [vmem:[%s1 + $0x38] sm:$0xff]
        %v344 = vld [vmem:[%s2] sm:$0x1]
        %v346 = vlaneseq
        %v347 = vshrl.u32 %v346, 7
        %v348 = vsub.s32 0, %v347
        %v349 = vrot.slane %v344, %v348
        %vm351 = vcmask 523264
        %v353 = vsel %vm351, %v335, 0
        %355 = vmatprep.subr.mxu0 0.0
        %356 = vmatpush1.msra.mxu0 %v336
        %357 = vmatprep.subr.mxu0 0.0
        %358 = vmatpush1.msra.mxu0 %v337
        %359 = vmatprep.subr.mxu0 0.0
        %360 = vmatpush1.msra.mxu0 %v338
        %361 = vmatprep.subr.mxu0 0.0
        %362 = vmatpush1.msra.mxu0 %v339
        %363 = vmatprep.subr.mxu0 0.0
        %364 = vmatpush1.msra.mxu0 %v340
        %365 = vmatprep.subr.mxu0 0.0
        %366 = vmatpush1.msra.mxu0 %v341
        %367 = vmatprep.subr.mxu0 0.0
        %368 = vmatpush1.msra.mxu0 %v342
        %369 = vmatprep.subr.mxu0 0.0
        %370 = vmatpush1.msra.mxu0 %v343
        %371 = vmatprep.subr.mxu0 0.0
        %372 = vmatpush1.msra.mxu0 0.0
        %373 = vmatprep.subr.mxu0 0.0
        %374 = vmatpush1.msra.mxu0 0.0
        %375 = vmatprep.subr.mxu0 0.0
        %376 = vmatpush1.msra.mxu0 0.0
        %377 = vmatprep.subr.mxu0 0.0
        %378 = vmatpush1.msra.mxu0 0.0
        %379 = vmatprep.subr.mxu0 0.0
        %380 = vmatpush1.msra.mxu0 0.0
        %381 = vmatprep.subr.mxu0 0.0
        %382 = vmatpush1.msra.mxu0 0.0
        %383 = vmatprep.subr.mxu0 0.0
        %384 = vmatpush1.msra.mxu0 0.0
        %385 = vmatprep.subr.mxu0 0.0
        %386 = vmatpush1.msra.mxu0 0.0
        %387 = vmatprep.subr.mxu0 0.0
        %388 = vmatpush1.msra.mxu0 0.0
        %389 = vmatprep.subr.mxu0 0.0
        %390 = vmatpush1.msra.mxu0 0.0
        %391 = vmatprep.subr.mxu0 0.0
        %392 = vmatpush1.msra.mxu0 0.0
        %393 = vmatprep.subr.mxu0 0.0
        %394 = vmatpush1.msra.mxu0 0.0
        %395 = vmatprep.subr.mxu0 0.0
        %396 = vmatpush1.msra.mxu0 0.0
        %397 = vmatprep.subr.mxu0 0.0
        %398 = vmatpush1.msra.mxu0 0.0
        %399 = vmatprep.subr.mxu0 0.0
        %400 = vmatpush1.msra.mxu0 0.0
        %401 = vmatprep.subr.mxu0 0.0
        %402 = vmatpush1.msra.mxu0 0.0
        %403 = vmatprep.subr.mxu0 0.0
        %404 = vmatpush1.msra.mxu0 0.0
        %405 = vmatprep.subr.mxu0 0.0
        %406 = vmatpush1.msra.mxu0 0.0
        %407 = vmatprep.subr.mxu0 0.0
        %408 = vmatpush1.msra.mxu0 0.0
        %409 = vmatprep.subr.mxu0 0.0
        %410 = vmatpush1.msra.mxu0 0.0
        %411 = vmatprep.subr.mxu0 0.0
        %412 = vmatpush1.msra.mxu0 0.0
        %413 = vmatprep.subr.mxu0 0.0
        %414 = vmatpush1.msra.mxu0 0.0
        %415 = vmatprep.subr.mxu0 0.0
        %416 = vmatpush1.msra.mxu0 0.0
        %417 = vmatprep.subr.mxu0 0.0
        %418 = vmatpush1.msra.mxu0 0.0
        %419 = vmatprep.mubr.f32.mxu0 0.0
        %420 = vmatmul.mubr.f32.gmra.mrb[0].mxu0 %v353
        %v421 = vpop.f32.mrb[0].mxu0
        %v422 = vadd.f32 %v349, %v421
        %v423 = vpop.f32.mrb[0].mxu0
        %424 = vdwg.mxu0
        %v425 = vld [vmem:[%s330] sm:$0xff]
        %v426 = vld [vmem:[%s334] sm:$0xff]
        %v427 = vld [vmem:[%s4] sm:$0xf]
        %v428 = vld [vmem:[%s5] sm:$0x3]
        %v429 = vlaneseq
        %v430 = vshrl.u32 %v429, 7
        %v431 = vlaneseq
        %v432 = vand.u32 %v431, 127
        %vm433 = vcmp.le.s32.totalorder %v432, %v430
        %435 = vrot.lane.b32.xlu0 %v422, 64
        %v436 = vpop.permute.xlu0 %435
        %vm438 = vcmask 130048
        %v439 = vsel %vm438, %v436, 0.0
        %440 = vadd.xlane.f32.xlu0 %v439
        %v441 = vpop.xlane.xlu0 %440
        %v442 = vrcp.pop 16.0
        %v443 = vmul.f32 %v441, %v442
        %v444 = vsub.f32 %v422, %v443
        %v445 = vmul.f32 %v444, %v444
        %447 = vrot.lane.b32.xlu0 %v445, 64
        %v448 = vpop.permute.xlu0 %447
        %v450 = vsel %vm438, %v448, 0.0
        %451 = vadd.xlane.f32.xlu0 %v450
        %v452 = vpop.xlane.xlu0 %451
        %v453 = vmul.f32 %v452, %v442
        %v454 = vadd.f32 %v453, 1e-05
        %v455 = vrsqrt.pop %v454
        %v456 = vmul.f32 %v444, %v455
        %v457 = vlaneseq
        %v458 = vshrl.u32 %v457, 7
        %v459 = vsub.s32 0, %v458
        %v460 = vrot.slane %v428, %v459
        %462 = vrot.lane.b32.xlu0 %v460, 64
        %v463 = vpop.permute.xlu0 %462
        %v465 = vmul.f32 %v456, %v463
        %v466 = vsub.f32 0.0, %v465
        %468 = vrot.lane.b32.xlu0 %v466, 62
        %v469 = vpop.permute.xlu0 %468
        %472 = vrot.lane.b32.xlu0 %v465, 66
        %v473 = vpop.permute.xlu0 %472
        %vm475 = vcmask 15360
        %v476 = vsel %vm475, %v469, %v473
        %478 = vrot.lane.b32.xlu0 %v425, 64
        %v479 = vpop.permute.xlu0 %478
        %v481 = vmul.f32 %v465, %v479
        %v482 = vmul.f32 %v476, %v426
        %484 = vrot.lane.b32.xlu0 %v482, 64
        %v485 = vpop.permute.xlu0 %484
        %v487 = vadd.f32 %v481, %v485
        %489 = vrot.lane.b32.xlu0 %v487, 64
        %v490 = vpop.permute.xlu0 %489
        %492 = vrot.lane.b32.xlu0 %v465, 64
        %v493 = vpop.permute.xlu0 %492
        %vm495 = vcmask 31744
        %v496 = vsel %vm495, %v490, %v493
        %497 = vrot.lane.b32.xlu0 %v422, 48
        %v498 = vpop.permute.xlu0 %497
        %v500 = vsel %vm438, %v498, 0.0
        %501 = vadd.xlane.f32.xlu0 %v500
        %v502 = vpop.xlane.xlu0 %501
        %v503 = vmul.f32 %v502, %v442
        %v504 = vsub.f32 %v422, %v503
        %v505 = vmul.f32 %v504, %v504
        %507 = vrot.lane.b32.xlu0 %v505, 48
        %v508 = vpop.permute.xlu0 %507
        %v510 = vsel %vm438, %v508, 0.0
        %511 = vadd.xlane.f32.xlu0 %v510
        %v512 = vpop.xlane.xlu0 %511
        %v513 = vmul.f32 %v512, %v442
        %v514 = vadd.f32 %v513, 1e-05
        %v515 = vrsqrt.pop %v514
        %v516 = vmul.f32 %v504, %v515
        %v517 = vlaneseq
        %v518 = vshrl.u32 %v517, 7
        %v519 = vsub.s32 1, %v518
        %v520 = vrot.slane %v428, %v519
        %522 = vrot.lane.b32.xlu0 %v520, 80
        %v523 = vpop.permute.xlu0 %522
        %v525 = vmul.f32 %v516, %v523
        %v526 = vsub.f32 0.0, %v525
        %528 = vrot.lane.b32.xlu0 %v526, 46
        %v529 = vpop.permute.xlu0 %528
        %532 = vrot.lane.b32.xlu0 %v525, 50
        %v533 = vpop.permute.xlu0 %532
        %v535 = vsel %vm475, %v529, %v533
        %536 = vrot.lane.b32.xlu0 %v425, 80
        %v537 = vpop.permute.xlu0 %536
        %v539 = vmul.f32 %v525, %v537
        %v540 = vmul.f32 %v535, %v426
        %542 = vrot.lane.b32.xlu0 %v540, 80
        %v543 = vpop.permute.xlu0 %542
        %v545 = vadd.f32 %v539, %v543
        %547 = vrot.lane.b32.xlu0 %v545, 48
        %v548 = vpop.permute.xlu0 %547
        %550 = vrot.lane.b32.xlu0 %v525, 48
        %v551 = vpop.permute.xlu0 %550
        %v553 = vsel %vm495, %v548, %v551
        %v554 = vsel %vm438, %v422, 0.0
        %555 = vadd.xlane.f32.xlu0 %v554
        %v556 = vpop.xlane.xlu0 %555
        %v557 = vmul.f32 %v556, %v442
        %v558 = vsub.f32 %v422, %v557
        %v559 = vmul.f32 %v558, %v558
        %v560 = vsel %vm438, %v559, 0.0
        %561 = vadd.xlane.f32.xlu0 %v560
        %v562 = vpop.xlane.xlu0 %561
        %v563 = vmul.f32 %v562, %v442
        %v564 = vadd.f32 %v563, 1e-05
        %v565 = vrsqrt.pop %v564
        %v566 = vmul.f32 %v558, %v565
        %v567 = vlaneseq
        %v568 = vshrl.u32 %v567, 7
        %v569 = vsub.s32 0, %v568
        %v570 = vrot.slane %v427, %v569
        %v571 = vmul.f32 %v566, %v570
        %v572 = vsub.f32 0.0, %v571
        %574 = vrot.lane.b32.xlu0 %v572, 126
        %v575 = vpop.permute.xlu0 %574
        %578 = vrot.lane.b32.xlu0 %v571, 2
        %v579 = vpop.permute.xlu0 %578
        %v581 = vsel %vm475, %v575, %v579
        %v582 = vmul.f32 %v571, %v425
        %v583 = vmul.f32 %v581, %v426
        %v584 = vadd.f32 %v582, %v583
        %v585 = vsel %vm495, %v584, %v571
        %v586 = vmul.f32 %v585, 0.25
        %v588 = vsel %vm438, %v586, 0
        %v591 = vsel %vm438, %v496, 0
        %593 = vmatprep.subr.mxu0 0.0
        %594 = vmatpush1.xpose.msra.mxu0 %v591
        %595 = vmatprep.subr.mxu0 0.0
        %596 = vmatpush1.xpose.msra.mxu0 0.0
        %597 = vmatprep.subr.mxu0 0.0
        %598 = vmatpush1.xpose.msra.mxu0 0.0
        %599 = vmatprep.subr.mxu0 0.0
        %600 = vmatpush1.xpose.msra.mxu0 0.0
        %601 = vmatprep.subr.mxu0 0.0
        %602 = vmatpush1.xpose.msra.mxu0 0.0
        %603 = vmatprep.subr.mxu0 0.0
        %604 = vmatpush1.xpose.msra.mxu0 0.0
        %605 = vmatprep.subr.mxu0 0.0
        %606 = vmatpush1.xpose.msra.mxu0 0.0
        %607 = vmatprep.subr.mxu0 0.0
        %608 = vmatpush1.xpose.msra.mxu0 0.0
        %609 = vmatprep.subr.mxu0 0.0
        %610 = vmatpush1.xpose.msra.mxu0 0.0
        %611 = vmatprep.subr.mxu0 0.0
        %612 = vmatpush1.xpose.msra.mxu0 0.0
        %613 = vmatprep.subr.mxu0 0.0
        %614 = vmatpush1.xpose.msra.mxu0 0.0
        %615 = vmatprep.subr.mxu0 0.0
        %616 = vmatpush1.xpose.msra.mxu0 0.0
        %617 = vmatprep.subr.mxu0 0.0
        %618 = vmatpush1.xpose.msra.mxu0 0.0
        %619 = vmatprep.subr.mxu0 0.0
        %620 = vmatpush1.xpose.msra.mxu0 0.0
        %621 = vmatprep.subr.mxu0 0.0
        %622 = vmatpush1.xpose.msra.mxu0 0.0
        %623 = vmatprep.subr.mxu0 0.0
        %624 = vmatpush1.xpose.msra.mxu0 0.0
        %625 = vmatprep.subr.mxu0 0.0
        %626 = vmatpush1.xpose.msra.mxu0 0.0
        %627 = vmatprep.subr.mxu0 0.0
        %628 = vmatpush1.xpose.msra.mxu0 0.0
        %629 = vmatprep.subr.mxu0 0.0
        %630 = vmatpush1.xpose.msra.mxu0 0.0
        %631 = vmatprep.subr.mxu0 0.0
        %632 = vmatpush1.xpose.msra.mxu0 0.0
        %633 = vmatprep.subr.mxu0 0.0
        %634 = vmatpush1.xpose.msra.mxu0 0.0
        %635 = vmatprep.subr.mxu0 0.0
        %636 = vmatpush1.xpose.msra.mxu0 0.0
        %637 = vmatprep.subr.mxu0 0.0
        %638 = vmatpush1.xpose.msra.mxu0 0.0
        %639 = vmatprep.subr.mxu0 0.0
        %640 = vmatpush1.xpose.msra.mxu0 0.0
        %641 = vmatprep.subr.mxu0 0.0
        %642 = vmatpush1.xpose.msra.mxu0 0.0
        %643 = vmatprep.subr.mxu0 0.0
        %644 = vmatpush1.xpose.msra.mxu0 0.0
        %645 = vmatprep.subr.mxu0 0.0
        %646 = vmatpush1.xpose.msra.mxu0 0.0
        %647 = vmatprep.subr.mxu0 0.0
        %648 = vmatpush1.xpose.msra.mxu0 0.0
        %649 = vmatprep.subr.mxu0 0.0
        %650 = vmatpush1.xpose.msra.mxu0 0.0
        %651 = vmatprep.subr.mxu0 0.0
        %652 = vmatpush1.xpose.msra.mxu0 0.0
        %653 = vmatprep.subr.mxu0 0.0
        %654 = vmatpush1.xpose.msra.mxu0 0.0
        %655 = vmatprep.subr.mxu0 0.0
        %656 = vmatpush1.xpose.msra.mxu0 0.0
        %657 = vmatprep.mubr.f32.mxu0 0.0
        %658 = vmatmul.mubr.f32.gmra.mrb[0].mxu0 %v588
        %v659 = vpop.f32.mrb[0].mxu0
        %v660 = vadd.f32 0.0, %v659
        %v661 = vpop.f32.mrb[0].mxu0
        %662 = vdwg.mxu0
        %v663 = vsel %vm433, %v660, -1e+30
        %vm664 = vcmask 64512
        %v665 = vsel %vm664, %v663, -inf
        %666 = vmax.xlane.f32.xlu0 %v665
        %v667 = vpop.xlane.xlu0 %666
        %v668 = vsub.f32 %v663, %v667
        %v669 = vmul.f32 %v668, 1.442695
        %v670 = vpow.pop %v669
        %v671 = vsel %vm664, %v670, 0.0
        %672 = vadd.xlane.f32.xlu0 %v671
        %v673 = vpop.xlane.xlu0 %672
        %v674 = vrcp.pop %v673
        %v675 = vmul.f32 %v670, %v674
        %676 = vrot.lane.b32.xlu0 %v422, 32
        %v677 = vpop.permute.xlu0 %676
        %v680 = vsel %vm664, %v675, 0
        %682 = vmatprep.subr.mxu0 0.0
        %683 = vmatpush1.msra.mxu0 %v677
        %684 = vmatprep.subr.mxu0 0.0
        %685 = vmatpush1.msra.mxu0 0.0
        %686 = vmatprep.subr.mxu0 0.0
        %687 = vmatpush1.msra.mxu0 0.0
        %688 = vmatprep.subr.mxu0 0.0
        %689 = vmatpush1.msra.mxu0 0.0
        %690 = vmatprep.subr.mxu0 0.0
        %691 = vmatpush1.msra.mxu0 0.0
        %692 = vmatprep.subr.mxu0 0.0
        %693 = vmatpush1.msra.mxu0 0.0
        %694 = vmatprep.subr.mxu0 0.0
        %695 = vmatpush1.msra.mxu0 0.0
        %696 = vmatprep.subr.mxu0 0.0
        %697 = vmatpush1.msra.mxu0 0.0
        %698 = vmatprep.subr.mxu0 0.0
        %699 = vmatpush1.msra.mxu0 0.0
        %700 = vmatprep.subr.mxu0 0.0
        %701 = vmatpush1.msra.mxu0 0.0
        %702 = vmatprep.subr.mxu0 0.0
        %703 = vmatpush1.msra.mxu0 0.0
        %704 = vmatprep.subr.mxu0 0.0
        %705 = vmatpush1.msra.mxu0 0.0
        %706 = vmatprep.subr.mxu0 0.0
        %707 = vmatpush1.msra.mxu0 0.0
        %708 = vmatprep.subr.mxu0 0.0
        %709 = vmatpush1.msra.mxu0 0.0
        %710 = vmatprep.subr.mxu0 0.0
        %711 = vmatpush1.msra.mxu0 0.0
        %712 = vmatprep.subr.mxu0 0.0
        %713 = vmatpush1.msra.mxu0 0.0
        %714 = vmatprep.subr.mxu0 0.0
        %715 = vmatpush1.msra.mxu0 0.0
        %716 = vmatprep.subr.mxu0 0.0
        %717 = vmatpush1.msra.mxu0 0.0
        %718 = vmatprep.subr.mxu0 0.0
        %719 = vmatpush1.msra.mxu0 0.0
        %720 = vmatprep.subr.mxu0 0.0
        %721 = vmatpush1.msra.mxu0 0.0
        %722 = vmatprep.subr.mxu0 0.0
        %723 = vmatpush1.msra.mxu0 0.0
        %724 = vmatprep.subr.mxu0 0.0
        %725 = vmatpush1.msra.mxu0 0.0
        %726 = vmatprep.subr.mxu0 0.0
        %727 = vmatpush1.msra.mxu0 0.0
        %728 = vmatprep.subr.mxu0 0.0
        %729 = vmatpush1.msra.mxu0 0.0
        %730 = vmatprep.subr.mxu0 0.0
        %731 = vmatpush1.msra.mxu0 0.0
        %732 = vmatprep.subr.mxu0 0.0
        %733 = vmatpush1.msra.mxu0 0.0
        %734 = vmatprep.subr.mxu0 0.0
        %735 = vmatpush1.msra.mxu0 0.0
        %736 = vmatprep.subr.mxu0 0.0
        %737 = vmatpush1.msra.mxu0 0.0
        %738 = vmatprep.subr.mxu0 0.0
        %739 = vmatpush1.msra.mxu0 0.0
        %740 = vmatprep.subr.mxu0 0.0
        %741 = vmatpush1.msra.mxu0 0.0
        %742 = vmatprep.subr.mxu0 0.0
        %743 = vmatpush1.msra.mxu0 0.0
        %744 = vmatprep.subr.mxu0 0.0
        %745 = vmatpush1.msra.mxu0 0.0
        %746 = vmatprep.mubr.f32.mxu0 0.0
        %747 = vmatmul.mubr.f32.gmra.mrb[0].mxu0 %v680
        %v748 = vpop.f32.mrb[0].mxu0
        %v749 = vadd.f32 0.0, %v748
        %v750 = vpop.f32.mrb[0].mxu0
        %751 = vdwg.mxu0
        %752 = vrot.lane.b32.xlu0 %v422, 112
        %v753 = vpop.permute.xlu0 %752
        %v755 = vsel %vm438, %v753, 0.0
        %756 = vadd.xlane.f32.xlu0 %v755
        %v757 = vpop.xlane.xlu0 %756
        %v758 = vmul.f32 %v757, %v442
        %v759 = vsub.f32 %v422, %v758
        %v760 = vmul.f32 %v759, %v759
        %762 = vrot.lane.b32.xlu0 %v760, 112
        %v763 = vpop.permute.xlu0 %762
        %v765 = vsel %vm438, %v763, 0.0
        %766 = vadd.xlane.f32.xlu0 %v765
        %v767 = vpop.xlane.xlu0 %766
        %v768 = vmul.f32 %v767, %v442
        %v769 = vadd.f32 %v768, 1e-05
        %v770 = vrsqrt.pop %v769
        %v771 = vmul.f32 %v759, %v770
        %v772 = vlaneseq
        %v773 = vshrl.u32 %v772, 7
        %v774 = vsub.s32 1, %v773
        %v775 = vrot.slane %v427, %v774
        %777 = vrot.lane.b32.xlu0 %v775, 16
        %v778 = vpop.permute.xlu0 %777
        %v780 = vmul.f32 %v771, %v778
        %v781 = vsub.f32 0.0, %v780
        %783 = vrot.lane.b32.xlu0 %v781, 110
        %v784 = vpop.permute.xlu0 %783
        %787 = vrot.lane.b32.xlu0 %v780, 114
        %v788 = vpop.permute.xlu0 %787
        %v790 = vsel %vm475, %v784, %v788
        %791 = vrot.lane.b32.xlu0 %v425, 16
        %v792 = vpop.permute.xlu0 %791
        %v794 = vmul.f32 %v780, %v792
        %v795 = vmul.f32 %v790, %v426
        %797 = vrot.lane.b32.xlu0 %v795, 16
        %v798 = vpop.permute.xlu0 %797
        %v800 = vadd.f32 %v794, %v798
        %802 = vrot.lane.b32.xlu0 %v800, 112
        %v803 = vpop.permute.xlu0 %802
        %805 = vrot.lane.b32.xlu0 %v780, 112
        %v806 = vpop.permute.xlu0 %805
        %v808 = vsel %vm495, %v803, %v806
        %v809 = vmul.f32 %v808, 0.25
        %v811 = vsel %vm438, %v809, 0
        %813 = vmatprep.subr.mxu0 0.0
        %814 = vmatpush1.xpose.msra.mxu0 %v591
        %815 = vmatprep.subr.mxu0 0.0
        %816 = vmatpush1.xpose.msra.mxu0 0.0
        %817 = vmatprep.subr.mxu0 0.0
        %818 = vmatpush1.xpose.msra.mxu0 0.0
        %819 = vmatprep.subr.mxu0 0.0
        %820 = vmatpush1.xpose.msra.mxu0 0.0
        %821 = vmatprep.subr.mxu0 0.0
        %822 = vmatpush1.xpose.msra.mxu0 0.0
        %823 = vmatprep.subr.mxu0 0.0
        %824 = vmatpush1.xpose.msra.mxu0 0.0
        %825 = vmatprep.subr.mxu0 0.0
        %826 = vmatpush1.xpose.msra.mxu0 0.0
        %827 = vmatprep.subr.mxu0 0.0
        %828 = vmatpush1.xpose.msra.mxu0 0.0
        %829 = vmatprep.subr.mxu0 0.0
        %830 = vmatpush1.xpose.msra.mxu0 0.0
        %831 = vmatprep.subr.mxu0 0.0
        %832 = vmatpush1.xpose.msra.mxu0 0.0
        %833 = vmatprep.subr.mxu0 0.0
        %834 = vmatpush1.xpose.msra.mxu0 0.0
        %835 = vmatprep.subr.mxu0 0.0
        %836 = vmatpush1.xpose.msra.mxu0 0.0
        %837 = vmatprep.subr.mxu0 0.0
        %838 = vmatpush1.xpose.msra.mxu0 0.0
        %839 = vmatprep.subr.mxu0 0.0
        %840 = vmatpush1.xpose.msra.mxu0 0.0
        %841 = vmatprep.subr.mxu0 0.0
        %842 = vmatpush1.xpose.msra.mxu0 0.0
        %843 = vmatprep.subr.mxu0 0.0
        %844 = vmatpush1.xpose.msra.mxu0 0.0
        %845 = vmatprep.subr.mxu0 0.0
        %846 = vmatpush1.xpose.msra.mxu0 0.0
        %847 = vmatprep.subr.mxu0 0.0
        %848 = vmatpush1.xpose.msra.mxu0 0.0
        %849 = vmatprep.subr.mxu0 0.0
        %850 = vmatpush1.xpose.msra.mxu0 0.0
        %851 = vmatprep.subr.mxu0 0.0
        %852 = vmatpush1.xpose.msra.mxu0 0.0
        %853 = vmatprep.subr.mxu0 0.0
        %854 = vmatpush1.xpose.msra.mxu0 0.0
        %855 = vmatprep.subr.mxu0 0.0
        %856 = vmatpush1.xpose.msra.mxu0 0.0
        %857 = vmatprep.subr.mxu0 0.0
        %858 = vmatpush1.xpose.msra.mxu0 0.0
        %859 = vmatprep.subr.mxu0 0.0
        %860 = vmatpush1.xpose.msra.mxu0 0.0
        %861 = vmatprep.subr.mxu0 0.0
        %862 = vmatpush1.xpose.msra.mxu0 0.0
        %863 = vmatprep.subr.mxu0 0.0
        %864 = vmatpush1.xpose.msra.mxu0 0.0
        %865 = vmatprep.subr.mxu0 0.0
        %866 = vmatpush1.xpose.msra.mxu0 0.0
        %867 = vmatprep.subr.mxu0 0.0
        %868 = vmatpush1.xpose.msra.mxu0 0.0
        %869 = vmatprep.subr.mxu0 0.0
        %870 = vmatpush1.xpose.msra.mxu0 0.0
        %871 = vmatprep.subr.mxu0 0.0
        %872 = vmatpush1.xpose.msra.mxu0 0.0
        %873 = vmatprep.subr.mxu0 0.0
        %874 = vmatpush1.xpose.msra.mxu0 0.0
        %875 = vmatprep.subr.mxu0 0.0
        %876 = vmatpush1.xpose.msra.mxu0 0.0
        %877 = vmatprep.mubr.f32.mxu0 0.0
        %878 = vmatmul.mubr.f32.gmra.mrb[0].mxu0 %v811
        %v879 = vpop.f32.mrb[0].mxu0
        %v880 = vadd.f32 0.0, %v879
        %v881 = vpop.f32.mrb[0].mxu0
        %882 = vdwg.mxu0
        %v883 = vsel %vm433, %v880, -1e+30
        %v884 = vsel %vm664, %v883, -inf
        %885 = vmax.xlane.f32.xlu0 %v884
        %v886 = vpop.xlane.xlu0 %885
        %v887 = vsub.f32 %v883, %v886
        %v888 = vmul.f32 %v887, 1.442695
        %v889 = vpow.pop %v888
        %v890 = vsel %vm664, %v889, 0.0
        %891 = vadd.xlane.f32.xlu0 %v890
        %v892 = vpop.xlane.xlu0 %891
        %v893 = vrcp.pop %v892
        %v894 = vmul.f32 %v889, %v893
        %v896 = vsel %vm664, %v894, 0
        %898 = vmatprep.subr.mxu0 0.0
        %899 = vmatpush1.msra.mxu0 %v677
        %900 = vmatprep.subr.mxu0 0.0
        %901 = vmatpush1.msra.mxu0 0.0
        %902 = vmatprep.subr.mxu0 0.0
        %903 = vmatpush1.msra.mxu0 0.0
        %904 = vmatprep.subr.mxu0 0.0
        %905 = vmatpush1.msra.mxu0 0.0
        %906 = vmatprep.subr.mxu0 0.0
        %907 = vmatpush1.msra.mxu0 0.0
        %908 = vmatprep.subr.mxu0 0.0
        %909 = vmatpush1.msra.mxu0 0.0
        %910 = vmatprep.subr.mxu0 0.0
        %911 = vmatpush1.msra.mxu0 0.0
        %912 = vmatprep.subr.mxu0 0.0
        %913 = vmatpush1.msra.mxu0 0.0
        %914 = vmatprep.subr.mxu0 0.0
        %915 = vmatpush1.msra.mxu0 0.0
        %916 = vmatprep.subr.mxu0 0.0
        %917 = vmatpush1.msra.mxu0 0.0
        %918 = vmatprep.subr.mxu0 0.0
        %919 = vmatpush1.msra.mxu0 0.0
        %920 = vmatprep.subr.mxu0 0.0
        %921 = vmatpush1.msra.mxu0 0.0
        %922 = vmatprep.subr.mxu0 0.0
        %923 = vmatpush1.msra.mxu0 0.0
        %924 = vmatprep.subr.mxu0 0.0
        %925 = vmatpush1.msra.mxu0 0.0
        %926 = vmatprep.subr.mxu0 0.0
        %927 = vmatpush1.msra.mxu0 0.0
        %928 = vmatprep.subr.mxu0 0.0
        %929 = vmatpush1.msra.mxu0 0.0
        %930 = vmatprep.subr.mxu0 0.0
        %931 = vmatpush1.msra.mxu0 0.0
        %932 = vmatprep.subr.mxu0 0.0
        %933 = vmatpush1.msra.mxu0 0.0
        %934 = vmatprep.subr.mxu0 0.0
        %935 = vmatpush1.msra.mxu0 0.0
        %936 = vmatprep.subr.mxu0 0.0
        %937 = vmatpush1.msra.mxu0 0.0
        %938 = vmatprep.subr.mxu0 0.0
        %939 = vmatpush1.msra.mxu0 0.0
        %940 = vmatprep.subr.mxu0 0.0
        %941 = vmatpush1.msra.mxu0 0.0
        %942 = vmatprep.subr.mxu0 0.0
        %943 = vmatpush1.msra.mxu0 0.0
        %944 = vmatprep.subr.mxu0 0.0
        %945 = vmatpush1.msra.mxu0 0.0
        %946 = vmatprep.subr.mxu0 0.0
        %947 = vmatpush1.msra.mxu0 0.0
        %948 = vmatprep.subr.mxu0 0.0
        %949 = vmatpush1.msra.mxu0 0.0
        %950 = vmatprep.subr.mxu0 0.0
        %951 = vmatpush1.msra.mxu0 0.0
        %952 = vmatprep.subr.mxu0 0.0
        %953 = vmatpush1.msra.mxu0 0.0
        %954 = vmatprep.subr.mxu0 0.0
        %955 = vmatpush1.msra.mxu0 0.0
        %956 = vmatprep.subr.mxu0 0.0
        %957 = vmatpush1.msra.mxu0 0.0
        %958 = vmatprep.subr.mxu0 0.0
        %959 = vmatpush1.msra.mxu0 0.0
        %960 = vmatprep.subr.mxu0 0.0
        %961 = vmatpush1.msra.mxu0 0.0
        %962 = vmatprep.mubr.f32.mxu0 0.0
        %963 = vmatmul.mubr.f32.gmra.mrb[0].mxu0 %v896
        %v964 = vpop.f32.mrb[0].mxu0
        %v965 = vadd.f32 0.0, %v964
        %v966 = vpop.f32.mrb[0].mxu0
        %967 = vdwg.mxu0
        %968 = vrot.lane.b32.xlu0 %v422, 96
        %v969 = vpop.permute.xlu0 %968
        %v971 = vsel %vm438, %v969, 0.0
        %972 = vadd.xlane.f32.xlu0 %v971
        %v973 = vpop.xlane.xlu0 %972
        %v974 = vmul.f32 %v973, %v442
        %v975 = vsub.f32 %v422, %v974
        %v976 = vmul.f32 %v975, %v975
        %978 = vrot.lane.b32.xlu0 %v976, 96
        %v979 = vpop.permute.xlu0 %978
        %v981 = vsel %vm438, %v979, 0.0
        %982 = vadd.xlane.f32.xlu0 %v981
        %v983 = vpop.xlane.xlu0 %982
        %v984 = vmul.f32 %v983, %v442
        %v985 = vadd.f32 %v984, 1e-05
        %v986 = vrsqrt.pop %v985
        %v987 = vmul.f32 %v975, %v986
        %v988 = vlaneseq
        %v989 = vshrl.u32 %v988, 7
        %v990 = vsub.s32 2, %v989
        %v991 = vrot.slane %v427, %v990
        %993 = vrot.lane.b32.xlu0 %v991, 32
        %v994 = vpop.permute.xlu0 %993
        %v996 = vmul.f32 %v987, %v994
        %v997 = vsub.f32 0.0, %v996
        %999 = vrot.lane.b32.xlu0 %v997, 94
        %v1000 = vpop.permute.xlu0 %999
        %1003 = vrot.lane.b32.xlu0 %v996, 98
        %v1004 = vpop.permute.xlu0 %1003
        %v1006 = vsel %vm475, %v1000, %v1004
        %1007 = vrot.lane.b32.xlu0 %v425, 32
        %v1008 = vpop.permute.xlu0 %1007
        %v1010 = vmul.f32 %v996, %v1008
        %v1011 = vmul.f32 %v1006, %v426
        %1013 = vrot.lane.b32.xlu0 %v1011, 32
        %v1014 = vpop.permute.xlu0 %1013
        %v1016 = vadd.f32 %v1010, %v1014
        %1018 = vrot.lane.b32.xlu0 %v1016, 96
        %v1019 = vpop.permute.xlu0 %1018
        %1021 = vrot.lane.b32.xlu0 %v996, 96
        %v1022 = vpop.permute.xlu0 %1021
        %v1024 = vsel %vm495, %v1019, %v1022
        %v1025 = vmul.f32 %v1024, 0.25
        %v1027 = vsel %vm438, %v1025, 0
        %v1030 = vsel %vm438, %v553, 0
        %1032 = vmatprep.subr.mxu0 0.0
        %1033 = vmatpush1.xpose.msra.mxu0 %v1030
        %1034 = vmatprep.subr.mxu0 0.0
        %1035 = vmatpush1.xpose.msra.mxu0 0.0
        %1036 = vmatprep.subr.mxu0 0.0
        %1037 = vmatpush1.xpose.msra.mxu0 0.0
        %1038 = vmatprep.subr.mxu0 0.0
        %1039 = vmatpush1.xpose.msra.mxu0 0.0
        %1040 = vmatprep.subr.mxu0 0.0
        %1041 = vmatpush1.xpose.msra.mxu0 0.0
        %1042 = vmatprep.subr.mxu0 0.0
        %1043 = vmatpush1.xpose.msra.mxu0 0.0
        %1044 = vmatprep.subr.mxu0 0.0
        %1045 = vmatpush1.xpose.msra.mxu0 0.0
        %1046 = vmatprep.subr.mxu0 0.0
        %1047 = vmatpush1.xpose.msra.mxu0 0.0
        %1048 = vmatprep.subr.mxu0 0.0
        %1049 = vmatpush1.xpose.msra.mxu0 0.0
        %1050 = vmatprep.subr.mxu0 0.0
        %1051 = vmatpush1.xpose.msra.mxu0 0.0
        %1052 = vmatprep.subr.mxu0 0.0
        %1053 = vmatpush1.xpose.msra.mxu0 0.0
        %1054 = vmatprep.subr.mxu0 0.0
        %1055 = vmatpush1.xpose.msra.mxu0 0.0
        %1056 = vmatprep.subr.mxu0 0.0
        %1057 = vmatpush1.xpose.msra.mxu0 0.0
        %1058 = vmatprep.subr.mxu0 0.0
        %1059 = vmatpush1.xpose.msra.mxu0 0.0
        %1060 = vmatprep.subr.mxu0 0.0
        %1061 = vmatpush1.xpose.msra.mxu0 0.0
        %1062 = vmatprep.subr.mxu0 0.0
        %1063 = vmatpush1.xpose.msra.mxu0 0.0
        %1064 = vmatprep.subr.mxu0 0.0
        %1065 = vmatpush1.xpose.msra.mxu0 0.0
        %1066 = vmatprep.subr.mxu0 0.0
        %1067 = vmatpush1.xpose.msra.mxu0 0.0
        %1068 = vmatprep.subr.mxu0 0.0
        %1069 = vmatpush1.xpose.msra.mxu0 0.0
        %1070 = vmatprep.subr.mxu0 0.0
        %1071 = vmatpush1.xpose.msra.mxu0 0.0
        %1072 = vmatprep.subr.mxu0 0.0
        %1073 = vmatpush1.xpose.msra.mxu0 0.0
        %1074 = vmatprep.subr.mxu0 0.0
        %1075 = vmatpush1.xpose.msra.mxu0 0.0
        %1076 = vmatprep.subr.mxu0 0.0
        %1077 = vmatpush1.xpose.msra.mxu0 0.0
        %1078 = vmatprep.subr.mxu0 0.0
        %1079 = vmatpush1.xpose.msra.mxu0 0.0
        %1080 = vmatprep.subr.mxu0 0.0
        %1081 = vmatpush1.xpose.msra.mxu0 0.0
        %1082 = vmatprep.subr.mxu0 0.0
        %1083 = vmatpush1.xpose.msra.mxu0 0.0
        %1084 = vmatprep.subr.mxu0 0.0
        %1085 = vmatpush1.xpose.msra.mxu0 0.0
        %1086 = vmatprep.subr.mxu0 0.0
        %1087 = vmatpush1.xpose.msra.mxu0 0.0
        %1088 = vmatprep.subr.mxu0 0.0
        %1089 = vmatpush1.xpose.msra.mxu0 0.0
        %1090 = vmatprep.subr.mxu0 0.0
        %1091 = vmatpush1.xpose.msra.mxu0 0.0
        %1092 = vmatprep.subr.mxu0 0.0
        %1093 = vmatpush1.xpose.msra.mxu0 0.0
        %1094 = vmatprep.subr.mxu0 0.0
        %1095 = vmatpush1.xpose.msra.mxu0 0.0
        %1096 = vmatprep.mubr.f32.mxu0 0.0
        %1097 = vmatmul.mubr.f32.gmra.mrb[0].mxu0 %v1027
        %v1098 = vpop.f32.mrb[0].mxu0
        %v1099 = vadd.f32 0.0, %v1098
        %v1100 = vpop.f32.mrb[0].mxu0
        %1101 = vdwg.mxu0
        %v1102 = vsel %vm433, %v1099, -1e+30
        %v1103 = vsel %vm664, %v1102, -inf
        %1104 = vmax.xlane.f32.xlu0 %v1103
        %v1105 = vpop.xlane.xlu0 %1104
        %v1106 = vsub.f32 %v1102, %v1105
        %v1107 = vmul.f32 %v1106, 1.442695
        %v1108 = vpow.pop %v1107
        %v1109 = vsel %vm664, %v1108, 0.0
        %1110 = vadd.xlane.f32.xlu0 %v1109
        %v1111 = vpop.xlane.xlu0 %1110
        %v1112 = vrcp.pop %v1111
        %v1113 = vmul.f32 %v1108, %v1112
        %1114 = vrot.lane.b32.xlu0 %v422, 16
        %v1115 = vpop.permute.xlu0 %1114
        %v1118 = vsel %vm664, %v1113, 0
        %1120 = vmatprep.subr.mxu0 0.0
        %1121 = vmatpush1.msra.mxu0 %v1115
        %1122 = vmatprep.subr.mxu0 0.0
        %1123 = vmatpush1.msra.mxu0 0.0
        %1124 = vmatprep.subr.mxu0 0.0
        %1125 = vmatpush1.msra.mxu0 0.0
        %1126 = vmatprep.subr.mxu0 0.0
        %1127 = vmatpush1.msra.mxu0 0.0
        %1128 = vmatprep.subr.mxu0 0.0
        %1129 = vmatpush1.msra.mxu0 0.0
        %1130 = vmatprep.subr.mxu0 0.0
        %1131 = vmatpush1.msra.mxu0 0.0
        %1132 = vmatprep.subr.mxu0 0.0
        %1133 = vmatpush1.msra.mxu0 0.0
        %1134 = vmatprep.subr.mxu0 0.0
        %1135 = vmatpush1.msra.mxu0 0.0
        %1136 = vmatprep.subr.mxu0 0.0
        %1137 = vmatpush1.msra.mxu0 0.0
        %1138 = vmatprep.subr.mxu0 0.0
        %1139 = vmatpush1.msra.mxu0 0.0
        %1140 = vmatprep.subr.mxu0 0.0
        %1141 = vmatpush1.msra.mxu0 0.0
        %1142 = vmatprep.subr.mxu0 0.0
        %1143 = vmatpush1.msra.mxu0 0.0
        %1144 = vmatprep.subr.mxu0 0.0
        %1145 = vmatpush1.msra.mxu0 0.0
        %1146 = vmatprep.subr.mxu0 0.0
        %1147 = vmatpush1.msra.mxu0 0.0
        %1148 = vmatprep.subr.mxu0 0.0
        %1149 = vmatpush1.msra.mxu0 0.0
        %1150 = vmatprep.subr.mxu0 0.0
        %1151 = vmatpush1.msra.mxu0 0.0
        %1152 = vmatprep.subr.mxu0 0.0
        %1153 = vmatpush1.msra.mxu0 0.0
        %1154 = vmatprep.subr.mxu0 0.0
        %1155 = vmatpush1.msra.mxu0 0.0
        %1156 = vmatprep.subr.mxu0 0.0
        %1157 = vmatpush1.msra.mxu0 0.0
        %1158 = vmatprep.subr.mxu0 0.0
        %1159 = vmatpush1.msra.mxu0 0.0
        %1160 = vmatprep.subr.mxu0 0.0
        %1161 = vmatpush1.msra.mxu0 0.0
        %1162 = vmatprep.subr.mxu0 0.0
        %1163 = vmatpush1.msra.mxu0 0.0
        %1164 = vmatprep.subr.mxu0 0.0
        %1165 = vmatpush1.msra.mxu0 0.0
        %1166 = vmatprep.subr.mxu0 0.0
        %1167 = vmatpush1.msra.mxu0 0.0
        %1168 = vmatprep.subr.mxu0 0.0
        %1169 = vmatpush1.msra.mxu0 0.0
        %1170 = vmatprep.subr.mxu0 0.0
        %1171 = vmatpush1.msra.mxu0 0.0
        %1172 = vmatprep.subr.mxu0 0.0
        %1173 = vmatpush1.msra.mxu0 0.0
        %1174 = vmatprep.subr.mxu0 0.0
        %1175 = vmatpush1.msra.mxu0 0.0
        %1176 = vmatprep.subr.mxu0 0.0
        %1177 = vmatpush1.msra.mxu0 0.0
        %1178 = vmatprep.subr.mxu0 0.0
        %1179 = vmatpush1.msra.mxu0 0.0
        %1180 = vmatprep.subr.mxu0 0.0
        %1181 = vmatpush1.msra.mxu0 0.0
        %1182 = vmatprep.subr.mxu0 0.0
        %1183 = vmatpush1.msra.mxu0 0.0
        %1184 = vmatprep.mubr.f32.mxu0 0.0
        %1185 = vmatmul.mubr.f32.gmra.mrb[0].mxu0 %v1118
        %v1186 = vpop.f32.mrb[0].mxu0
        %v1187 = vadd.f32 0.0, %v1186
        %v1188 = vpop.f32.mrb[0].mxu0
        %1189 = vdwg.mxu0
        %1190 = vrot.lane.b32.xlu0 %v422, 80
        %v1191 = vpop.permute.xlu0 %1190
        %v1193 = vsel %vm438, %v1191, 0.0
        %1194 = vadd.xlane.f32.xlu0 %v1193
        %v1195 = vpop.xlane.xlu0 %1194
        %v1196 = vmul.f32 %v1195, %v442
        %v1197 = vsub.f32 %v422, %v1196
        %v1198 = vmul.f32 %v1197, %v1197
        %1200 = vrot.lane.b32.xlu0 %v1198, 80
        %v1201 = vpop.permute.xlu0 %1200
        %v1203 = vsel %vm438, %v1201, 0.0
        %1204 = vadd.xlane.f32.xlu0 %v1203
        %v1205 = vpop.xlane.xlu0 %1204
        %v1206 = vmul.f32 %v1205, %v442
        %v1207 = vadd.f32 %v1206, 1e-05
        %v1208 = vrsqrt.pop %v1207
        %v1209 = vmul.f32 %v1197, %v1208
        %v1210 = vlaneseq
        %v1211 = vshrl.u32 %v1210, 7
        %v1212 = vsub.s32 3, %v1211
        %v1213 = vrot.slane %v427, %v1212
        %1215 = vrot.lane.b32.xlu0 %v1213, 48
        %v1216 = vpop.permute.xlu0 %1215
        %v1218 = vmul.f32 %v1209, %v1216
        %v1219 = vsub.f32 0.0, %v1218
        %1221 = vrot.lane.b32.xlu0 %v1219, 78
        %v1222 = vpop.permute.xlu0 %1221
        %1225 = vrot.lane.b32.xlu0 %v1218, 82
        %v1226 = vpop.permute.xlu0 %1225
        %v1228 = vsel %vm475, %v1222, %v1226
        %1229 = vrot.lane.b32.xlu0 %v425, 48
        %v1230 = vpop.permute.xlu0 %1229
        %v1232 = vmul.f32 %v1218, %v1230
        %v1233 = vmul.f32 %v1228, %v426
        %1235 = vrot.lane.b32.xlu0 %v1233, 48
        %v1236 = vpop.permute.xlu0 %1235
        %v1238 = vadd.f32 %v1232, %v1236
        %1240 = vrot.lane.b32.xlu0 %v1238, 80
        %v1241 = vpop.permute.xlu0 %1240
        %1243 = vrot.lane.b32.xlu0 %v1218, 80
        %v1244 = vpop.permute.xlu0 %1243
        %v1246 = vsel %vm495, %v1241, %v1244
        %v1247 = vmul.f32 %v1246, 0.25
        %v1249 = vsel %vm438, %v1247, 0
        %1251 = vmatprep.subr.mxu0 0.0
        %1252 = vmatpush1.xpose.msra.mxu0 %v1030
        %1253 = vmatprep.subr.mxu0 0.0
        %1254 = vmatpush1.xpose.msra.mxu0 0.0
        %1255 = vmatprep.subr.mxu0 0.0
        %1256 = vmatpush1.xpose.msra.mxu0 0.0
        %1257 = vmatprep.subr.mxu0 0.0
        %1258 = vmatpush1.xpose.msra.mxu0 0.0
        %1259 = vmatprep.subr.mxu0 0.0
        %1260 = vmatpush1.xpose.msra.mxu0 0.0
        %1261 = vmatprep.subr.mxu0 0.0
        %1262 = vmatpush1.xpose.msra.mxu0 0.0
        %1263 = vmatprep.subr.mxu0 0.0
        %1264 = vmatpush1.xpose.msra.mxu0 0.0
        %1265 = vmatprep.subr.mxu0 0.0
        %1266 = vmatpush1.xpose.msra.mxu0 0.0
        %1267 = vmatprep.subr.mxu0 0.0
        %1268 = vmatpush1.xpose.msra.mxu0 0.0
        %1269 = vmatprep.subr.mxu0 0.0
        %1270 = vmatpush1.xpose.msra.mxu0 0.0
        %1271 = vmatprep.subr.mxu0 0.0
        %1272 = vmatpush1.xpose.msra.mxu0 0.0
        %1273 = vmatprep.subr.mxu0 0.0
        %1274 = vmatpush1.xpose.msra.mxu0 0.0
        %1275 = vmatprep.subr.mxu0 0.0
        %1276 = vmatpush1.xpose.msra.mxu0 0.0
        %1277 = vmatprep.subr.mxu0 0.0
        %1278 = vmatpush1.xpose.msra.mxu0 0.0
        %1279 = vmatprep.subr.mxu0 0.0
        %1280 = vmatpush1.xpose.msra.mxu0 0.0
        %1281 = vmatprep.subr.mxu0 0.0
        %1282 = vmatpush1.xpose.msra.mxu0 0.0
        %1283 = vmatprep.subr.mxu0 0.0
        %1284 = vmatpush1.xpose.msra.mxu0 0.0
        %1285 = vmatprep.subr.mxu0 0.0
        %1286 = vmatpush1.xpose.msra.mxu0 0.0
        %1287 = vmatprep.subr.mxu0 0.0
        %1288 = vmatpush1.xpose.msra.mxu0 0.0
        %1289 = vmatprep.subr.mxu0 0.0
        %1290 = vmatpush1.xpose.msra.mxu0 0.0
        %1291 = vmatprep.subr.mxu0 0.0
        %1292 = vmatpush1.xpose.msra.mxu0 0.0
        %1293 = vmatprep.subr.mxu0 0.0
        %1294 = vmatpush1.xpose.msra.mxu0 0.0
        %1295 = vmatprep.subr.mxu0 0.0
        %1296 = vmatpush1.xpose.msra.mxu0 0.0
        %1297 = vmatprep.subr.mxu0 0.0
        %1298 = vmatpush1.xpose.msra.mxu0 0.0
        %1299 = vmatprep.subr.mxu0 0.0
        %1300 = vmatpush1.xpose.msra.mxu0 0.0
        %1301 = vmatprep.subr.mxu0 0.0
        %1302 = vmatpush1.xpose.msra.mxu0 0.0
        %1303 = vmatprep.subr.mxu0 0.0
        %1304 = vmatpush1.xpose.msra.mxu0 0.0
        %1305 = vmatprep.subr.mxu0 0.0
        %1306 = vmatpush1.xpose.msra.mxu0 0.0
        %1307 = vmatprep.subr.mxu0 0.0
        %1308 = vmatpush1.xpose.msra.mxu0 0.0
        %1309 = vmatprep.subr.mxu0 0.0
        %1310 = vmatpush1.xpose.msra.mxu0 0.0
        %1311 = vmatprep.subr.mxu0 0.0
        %1312 = vmatpush1.xpose.msra.mxu0 0.0
        %1313 = vmatprep.subr.mxu0 0.0
        %1314 = vmatpush1.xpose.msra.mxu0 0.0
        %1315 = vmatprep.mubr.f32.mxu0 0.0
        %1316 = vmatmul.mubr.f32.gmra.mrb[0].mxu0 %v1249
        %v1317 = vpop.f32.mrb[0].mxu0
        %v1318 = vadd.f32 0.0, %v1317
        %v1319 = vpop.f32.mrb[0].mxu0
        %1320 = vdwg.mxu0
        %v1321 = vsel %vm433, %v1318, -1e+30
        %v1322 = vsel %vm664, %v1321, -inf
        %1323 = vmax.xlane.f32.xlu0 %v1322
        %v1324 = vpop.xlane.xlu0 %1323
        %v1325 = vsub.f32 %v1321, %v1324
        %v1326 = vmul.f32 %v1325, 1.442695
        %v1327 = vpow.pop %v1326
        %v1328 = vsel %vm664, %v1327, 0.0
        %1329 = vadd.xlane.f32.xlu0 %v1328
        %v1330 = vpop.xlane.xlu0 %1329
        %v1331 = vrcp.pop %v1330
        %v1332 = vmul.f32 %v1327, %v1331
        %v1334 = vsel %vm664, %v1332, 0
        %1336 = vmatprep.subr.mxu0 0.0
        %1337 = vmatpush1.msra.mxu0 %v1115
        %1338 = vmatprep.subr.mxu0 0.0
        %1339 = vmatpush1.msra.mxu0 0.0
        %1340 = vmatprep.subr.mxu0 0.0
        %1341 = vmatpush1.msra.mxu0 0.0
        %1342 = vmatprep.subr.mxu0 0.0
        %1343 = vmatpush1.msra.mxu0 0.0
        %1344 = vmatprep.subr.mxu0 0.0
        %1345 = vmatpush1.msra.mxu0 0.0
        %1346 = vmatprep.subr.mxu0 0.0
        %1347 = vmatpush1.msra.mxu0 0.0
        %1348 = vmatprep.subr.mxu0 0.0
        %1349 = vmatpush1.msra.mxu0 0.0
        %1350 = vmatprep.subr.mxu0 0.0
        %1351 = vmatpush1.msra.mxu0 0.0
        %1352 = vmatprep.subr.mxu0 0.0
        %1353 = vmatpush1.msra.mxu0 0.0
        %1354 = vmatprep.subr.mxu0 0.0
        %1355 = vmatpush1.msra.mxu0 0.0
        %1356 = vmatprep.subr.mxu0 0.0
        %1357 = vmatpush1.msra.mxu0 0.0
        %1358 = vmatprep.subr.mxu0 0.0
        %1359 = vmatpush1.msra.mxu0 0.0
        %1360 = vmatprep.subr.mxu0 0.0
        %1361 = vmatpush1.msra.mxu0 0.0
        %1362 = vmatprep.subr.mxu0 0.0
        %1363 = vmatpush1.msra.mxu0 0.0
        %1364 = vmatprep.subr.mxu0 0.0
        %1365 = vmatpush1.msra.mxu0 0.0
        %1366 = vmatprep.subr.mxu0 0.0
        %1367 = vmatpush1.msra.mxu0 0.0
        %1368 = vmatprep.subr.mxu0 0.0
        %1369 = vmatpush1.msra.mxu0 0.0
        %1370 = vmatprep.subr.mxu0 0.0
        %1371 = vmatpush1.msra.mxu0 0.0
        %1372 = vmatprep.subr.mxu0 0.0
        %1373 = vmatpush1.msra.mxu0 0.0
        %1374 = vmatprep.subr.mxu0 0.0
        %1375 = vmatpush1.msra.mxu0 0.0
        %1376 = vmatprep.subr.mxu0 0.0
        %1377 = vmatpush1.msra.mxu0 0.0
        %1378 = vmatprep.subr.mxu0 0.0
        %1379 = vmatpush1.msra.mxu0 0.0
        %1380 = vmatprep.subr.mxu0 0.0
        %1381 = vmatpush1.msra.mxu0 0.0
        %1382 = vmatprep.subr.mxu0 0.0
        %1383 = vmatpush1.msra.mxu0 0.0
        %1384 = vmatprep.subr.mxu0 0.0
        %1385 = vmatpush1.msra.mxu0 0.0
        %1386 = vmatprep.subr.mxu0 0.0
        %1387 = vmatpush1.msra.mxu0 0.0
        %1388 = vmatprep.subr.mxu0 0.0
        %1389 = vmatpush1.msra.mxu0 0.0
        %1390 = vmatprep.subr.mxu0 0.0
        %1391 = vmatpush1.msra.mxu0 0.0
        %1392 = vmatprep.subr.mxu0 0.0
        %1393 = vmatpush1.msra.mxu0 0.0
        %1394 = vmatprep.subr.mxu0 0.0
        %1395 = vmatpush1.msra.mxu0 0.0
        %1396 = vmatprep.subr.mxu0 0.0
        %1397 = vmatpush1.msra.mxu0 0.0
        %1398 = vmatprep.subr.mxu0 0.0
        %1399 = vmatpush1.msra.mxu0 0.0
        %1400 = vmatprep.mubr.f32.mxu0 0.0
        %1401 = vmatmul.mubr.f32.gmra.mrb[0].mxu0 %v1334
        %v1402 = vpop.f32.mrb[0].mxu0
        %v1403 = vadd.f32 0.0, %v1402
        %v1404 = vpop.f32.mrb[0].mxu0
        %1405 = vdwg.mxu0
        %1407 = vrot.lane.b32.xlu0 %v965, 16
        %v1408 = vpop.permute.xlu0 %1407
        %1411 = vrot.lane.b32.xlu0 %v1187, 32
        %v1412 = vpop.permute.xlu0 %1411
        %1415 = vrot.lane.b32.xlu0 %v1403, 48
        %v1416 = vpop.permute.xlu0 %1415
        %v1418 = vsel %vm438, %v749, %v1408
        %vm1419 = vcmask 261120
        %v1420 = vsel %vm1419, %v1418, %v1412
        %vm1421 = vcmask 392192
        %v1422 = vsel %vm1421, %v1420, %v1416
        %v1423 = vld [vmem:[%s3] sm:$0xff]
        %v1424 = vld [vmem:[%s3 + $0x8] sm:$0xff]
        %v1425 = vld [vmem:[%s3 + $0x10] sm:$0xff]
        %v1426 = vld [vmem:[%s3 + $0x18] sm:$0xff]
        %v1427 = vld [vmem:[%s3 + $0x20] sm:$0xff]
        %v1428 = vld [vmem:[%s3 + $0x28] sm:$0xff]
        %v1429 = vld [vmem:[%s3 + $0x30] sm:$0xff]
        %v1430 = vld [vmem:[%s3 + $0x38] sm:$0xff]
        %v1432 = vsel %vm351, %v1422, 0
        %1434 = vmatprep.subr.mxu0 0.0
        %1435 = vmatpush1.msra.mxu0 %v1423
        %1436 = vmatprep.subr.mxu0 0.0
        %1437 = vmatpush1.msra.mxu0 %v1424
        %1438 = vmatprep.subr.mxu0 0.0
        %1439 = vmatpush1.msra.mxu0 %v1425
        %1440 = vmatprep.subr.mxu0 0.0
        %1441 = vmatpush1.msra.mxu0 %v1426
        %1442 = vmatprep.subr.mxu0 0.0
        %1443 = vmatpush1.msra.mxu0 %v1427
        %1444 = vmatprep.subr.mxu0 0.0
        %1445 = vmatpush1.msra.mxu0 %v1428
        %1446 = vmatprep.subr.mxu0 0.0
        %1447 = vmatpush1.msra.mxu0 %v1429
        %1448 = vmatprep.subr.mxu0 0.0
        %1449 = vmatpush1.msra.mxu0 %v1430
        %1450 = vmatprep.subr.mxu0 0.0
        %1451 = vmatpush1.msra.mxu0 0.0
        %1452 = vmatprep.subr.mxu0 0.0
        %1453 = vmatpush1.msra.mxu0 0.0
        %1454 = vmatprep.subr.mxu0 0.0
        %1455 = vmatpush1.msra.mxu0 0.0
        %1456 = vmatprep.subr.mxu0 0.0
        %1457 = vmatpush1.msra.mxu0 0.0
        %1458 = vmatprep.subr.mxu0 0.0
        %1459 = vmatpush1.msra.mxu0 0.0
        %1460 = vmatprep.subr.mxu0 0.0
        %1461 = vmatpush1.msra.mxu0 0.0
        %1462 = vmatprep.subr.mxu0 0.0
        %1463 = vmatpush1.msra.mxu0 0.0
        %1464 = vmatprep.subr.mxu0 0.0
        %1465 = vmatpush1.msra.mxu0 0.0
        %1466 = vmatprep.subr.mxu0 0.0
        %1467 = vmatpush1.msra.mxu0 0.0
        %1468 = vmatprep.subr.mxu0 0.0
        %1469 = vmatpush1.msra.mxu0 0.0
        %1470 = vmatprep.subr.mxu0 0.0
        %1471 = vmatpush1.msra.mxu0 0.0
        %1472 = vmatprep.subr.mxu0 0.0
        %1473 = vmatpush1.msra.mxu0 0.0
        %1474 = vmatprep.subr.mxu0 0.0
        %1475 = vmatpush1.msra.mxu0 0.0
        %1476 = vmatprep.subr.mxu0 0.0
        %1477 = vmatpush1.msra.mxu0 0.0
        %1478 = vmatprep.subr.mxu0 0.0
        %1479 = vmatpush1.msra.mxu0 0.0
        %1480 = vmatprep.subr.mxu0 0.0
        %1481 = vmatpush1.msra.mxu0 0.0
        %1482 = vmatprep.subr.mxu0 0.0
        %1483 = vmatpush1.msra.mxu0 0.0
        %1484 = vmatprep.subr.mxu0 0.0
        %1485 = vmatpush1.msra.mxu0 0.0
        %1486 = vmatprep.subr.mxu0 0.0
        %1487 = vmatpush1.msra.mxu0 0.0
        %1488 = vmatprep.subr.mxu0 0.0
        %1489 = vmatpush1.msra.mxu0 0.0
        %1490 = vmatprep.subr.mxu0 0.0
        %1491 = vmatpush1.msra.mxu0 0.0
        %1492 = vmatprep.subr.mxu0 0.0
        %1493 = vmatpush1.msra.mxu0 0.0
        %1494 = vmatprep.subr.mxu0 0.0
        %1495 = vmatpush1.msra.mxu0 0.0
        %1496 = vmatprep.subr.mxu0 0.0
        %1497 = vmatpush1.msra.mxu0 0.0
        %1498 = vmatprep.mubr.f32.mxu0 0.0
        %1499 = vmatmul.mubr.f32.gmra.mrb[0].mxu0 %v1432
        %v1500 = vpop.f32.mrb[0].mxu0
        %v1501 = vadd.f32 0.0, %v1500
        %v1502 = vpop.f32.mrb[0].mxu0
        %1503 = vdwg.mxu0
        %1504 = vst.msk [vmem:[%s322] sm:$0xff] %vm351, %v1501
        %s1505 = sand.u32 %s213, 1
        %s1506 = scalar_lea.sflag [#allocation3], %s1505
        %s1507 = sand.u32 %s213, 1
        %s1508 = smul.addr %s1507, 8
        %s1509 = scalar_lea.vmem [#allocation2], %s1508
        // Predicated region
        $region53: #{stablelm_attention_forward.1} parent=51 // pred_check
          %p1510 = pneg %p223
        $region54: #{stablelm_attention_forward.1} parent=51 // pred_check_branch
          %1512 = sbr.rel (%p1510) target = $region56
        $region55: #{stablelm_attention_forward.1} parent=51 // pred_region
          %s1514 = ssub.s32 128, 128
          %1515 = vsyncadd %s1506, %s1514
          %s1516 = smul.addr %s22, 128
          %s1517 = scalar_lea.hbm %s8, %s1516
          %s1519 = sshll.u32 %s1509, 4
          %s1520 = int_to_ptr.vmem [resolvable:$true] %s1519
          %1522 = dma.vmem_to_hbm [thread:$0]  %s1520, 128, %s1517, %s1506
        $region56: #{stablelm_attention_forward.1} parent=51 // pred_fallthru
          _
      $region52: #{stablelm_attention_forward.1} parent=5 // pred_fallthru
        _
      %p1523 = scmp.le.s32.totalorder 2, %s17
      // Predicated region
      $region57: #{stablelm_attention_forward.1} parent=5 // pred_check
        %p1524 = pneg %p1523
      $region58: #{stablelm_attention_forward.1} parent=5 // pred_check_branch
        %1526 = sbr.rel (%p1524) target = $region60
      $region59: #{stablelm_attention_forward.1} parent=5 // pred_region
        %s1527 = ssub.s32 %s17, 2
        // Predicated region
        $region61: #{stablelm_attention_forward.1} parent=59 // pred_check
          %p1528 = pneg %p229
        $region62: #{stablelm_attention_forward.1} parent=59 // pred_check_branch
          %1530 = sbr.rel (%p1528) target = $region64
        $region63: #{stablelm_attention_forward.1} parent=59 // pred_region
          %s1531 = sand.u32 %s214, 1
          %s1532 = scalar_lea.sflag [#allocation3], %s1531
          %s1533 = sand.u32 %s214, 1
          %s1534 = smul.addr %s1533, 8
          %s1535 = scalar_lea.vmem [#allocation2], %s1534
          %1536 = dma.done %s1532, 128
        $region64: #{stablelm_attention_forward.1} parent=59 // pred_fallthru
          _
      $region60: #{stablelm_attention_forward.1} parent=5 // pred_fallthru
        _
    $region6: #{stablelm_attention_forward.1} parent=1 // loop_footer
      %s21 = sadd.s32 1, %s17
    $region7: #{stablelm_attention_forward.1} parent=1 // loop_footer_branch
      %16 = sbr.rel target = $region3
    $region8: #{stablelm_attention_forward.1} parent=1 // loop_exit
      _
    %1537 = vsyncpa [#allocation3], 1
    %s1538 = scalar_lea.sflag [#allocation3], 1
    %1539 = vsyncpa %s1538, 1

</llo_original>
